<compile_context>
chip_gen: v7x
topology: tpu7x:2x2x1
jax: 0.10.0
libtpu: 0.0.40
codegen_flags: <defaults>
</compile_context>

<pallas_src>
import functools

import jax
import jax.numpy as jnp
from jax.experimental import pallas as pl
from jax.experimental.pallas import tpu as pltpu


# --------------------------------------------------------------------------
# Kernel
# --------------------------------------------------------------------------
def _small_matmul_f32(w_ref, v):
    """(O, K) @ (K, TL) with tiny O, K: unrolled VPU broadcast-FMA (f32 acc)
    instead of a >95%-zero-padded MXU push."""
    w = w_ref[...].astype(jnp.float32)
    v = v.astype(jnp.float32)
    k_dim = w.shape[1]
    acc = w[:, 0:1] * v[0:1, :]
    for k in range(1, k_dim):
        acc = acc + w[:, k:k + 1] * v[k:k + 1, :]
    return acc


def _make_kernel(use_vpu):
    def kernel(x_ref, w1_ref, b1_ref, w2_ref, b2_ref, w3_ref, b3_ref, o_ref):
        if use_vpu:
            mm = _small_matmul_f32
        else:
            mm = lambda w_ref, v: jnp.dot(
                w_ref[...], v, preferred_element_type=jnp.float32)
        x = x_ref[0]                                   # (C, TL), native dtype
        h1 = jnp.maximum(mm(w1_ref, x) + b1_ref[...], 0.0)    # (h, TL) f32
        h2 = jnp.maximum(mm(w2_ref, h1) + b2_ref[...], 0.0)   # (h, TL) f32
        y = mm(w3_ref, h2) + b3_ref[...]                       # (C, TL) f32
        o_ref[0] = y.astype(o_ref.dtype)
    return kernel


# --------------------------------------------------------------------------
# Tiling / VMEM budgeting
# --------------------------------------------------------------------------
def _vmem_budget():
    """Per-generation scoped-VMEM budget (bytes) with headroom."""
    cap = 64 << 20
    try:
        info = pltpu.get_tpu_info()
        cap = int(getattr(info, "vmem_capacity_bytes", cap))
    except Exception:
        pass
    if cap >= (128 << 20):
        return 100 << 20        # v5e / v6e: 128 MiB physical
    return 48 << 20             # v7x: 64 MiB physical -> leave compiler headroom


def _choose_tile(N, C, HW, h, itemsize, weight_bytes, vmem_budget):
    """Lane (spatial) tile: multiple of 128, ~4 MiB x-slab per step, fits the
    per-generation VMEM budget including double buffers and f32 intermediates."""
    if HW <= 128:
        return int(HW)                                  # full-dim block (legal)
    # VMEM bytes consumed per unit of tl:
    #   double-buffered (x in + y out) tiles  +  f32 intermediates h1, h2, y
    per_lane = 2 * 2 * C * itemsize + (2 * h + C) * 4
    avail = vmem_budget - 2 * weight_bytes - (4 << 20)
    tl_vmem = max(avail // per_lane, 128)
    tl_slab = max((4 << 20) // max(C * itemsize, 1), 128)   # ~4 MiB x-slab/step
    tl = min(int(tl_vmem), int(tl_slab), int(HW))
    tl = max((tl // 128) * 128, 128)
    # Keep enough grid steps to feed both TensorCores (v7x) + pipeline depth.
    steps = lambda t: N * (-(-HW // t))
    while tl >= 1024 and steps(tl) < 8:
        tl = max(((tl // 2) // 128) * 128, 512)
    return int(tl)


def _vmem_limit_bytes(C, h, tl, itemsize, weight_bytes, budget):
    need = (2 * 2 * C * tl * itemsize        # double-buffered x-in + y-out tiles
            + 2 * weight_bytes               # weights/biases (worst case buffered)
            + (2 * h + C) * tl * 4           # f32 intermediates
            + (2 << 20))                     # semaphores / internal scratch slack
    return int(min(max(need, 32 << 20), budget))


# --------------------------------------------------------------------------
# pallas_call wrapper
# --------------------------------------------------------------------------
@functools.partial(
    jax.jit,
    static_argnames=("tl", "use_vpu", "vmem_limit", "single_buffer_weights"))
def mlp_flat(x3, w1, b1, w2, b2, w3, b3, *, tl, use_vpu, vmem_limit,
             single_buffer_weights):
    """x3: (N, C, HW) -> (N, C, HW).  tl = spatial (lane) tile size."""
    N, C, HW = x3.shape
    h = w1.shape[0]
    grid = (N, pl.cdiv(HW, tl))

    # Weights / biases: full-array blocks, grid-invariant index map. Single
    # buffer them (no point double-buffering a constant block).
    def const_spec(shape):
        idx = lambda n, s: (0,) * len(shape)
        if single_buffer_weights:
            return pl.BlockSpec(shape, idx, pipeline_mode=pl.Buffered(1))
        return pl.BlockSpec(shape, idx)

    params = (w1, b1, w2, b2, w3, b3)
    itemsize = x3.dtype.itemsize
    weight_bytes = sum(int(p.size) * p.dtype.itemsize for p in params)
    flops = 2 * N * HW * (C * h + h * h + h * C)
    bytes_accessed = 2 * int(x3.size) * itemsize + weight_bytes

    return pl.pallas_call(
        _make_kernel(use_vpu),
        out_shape=jax.ShapeDtypeStruct((N, C, HW), x3.dtype),
        grid_spec=pltpu.PrefetchScalarGridSpec(
            num_scalar_prefetch=0,
            grid=grid,
            in_specs=[
                pl.BlockSpec((1, C, tl), lambda n, s: (n, 0, s)),
                const_spec((h, C)), const_spec((h, 1)),
                const_spec((h, h)), const_spec((h, 1)),
                const_spec((C, h)), const_spec((C, 1)),
            ],
            out_specs=pl.BlockSpec((1, C, tl), lambda n, s: (n, 0, s)),
        ),
        compiler_params=pltpu.CompilerParams(
            dimension_semantics=("parallel", "parallel"),
            vmem_limit_bytes=int(vmem_limit),
        ),
        cost_estimate=pl.CostEstimate(
            flops=int(flops), transcendentals=0,
            bytes_accessed=int(bytes_accessed)),
    )(x3, *params)


def mlp_forward(inputs, flag, params):
    """Mirrors MLP.forward: inputs is a sequence, uses inputs[0]; returns (y, None)."""
    del flag  # unused, as in the PyTorch module
    x = inputs[0]                         # NCHW, (N, C, H, W)
    N, C, H, W = x.shape
    HW = H * W
    h = params[0].shape[0]
    itemsize = x.dtype.itemsize
    weight_bytes = sum(int(p.size) * p.dtype.itemsize for p in params)

    budget = _vmem_budget()
    tl = _choose_tile(N, C, HW, h, itemsize, weight_bytes, budget)
    vmem_limit = _vmem_limit_bytes(C, h, tl, itemsize, weight_bytes, budget)
    use_vpu = (C <= 16 and h <= 16)       # MXU would be >95% zero-padded here

    x3 = x.reshape(N, C, HW)              # free relayout (merge contiguous dims)

    attempts = [dict(use_vpu=use_vpu, single_buffer_weights=True),
                dict(use_vpu=use_vpu, single_buffer_weights=False)]
    if use_vpu:
        attempts.append(dict(use_vpu=False, single_buffer_weights=False))

    y3, last_err = None, None
    for opts in attempts:
        try:
            y3 = mlp_flat(x3, *params, tl=tl, vmem_limit=vmem_limit, **opts)
            break
        except Exception as e:            # e.g. older jax without pl.Buffered
            last_err = e
            y3 = None
    if y3 is None:
        raise last_err
    return (y3.reshape(N, C, H, W), None)


# --------------------------------------------------------------------------
# Params / reference
# --------------------------------------------------------------------------
def init_params(key, f_dim, dtype=jnp.float32):
    """Deterministic init matching nn.Conv2d(Cin, Cout, 1): weight stored as
    (Cout, Cin) (conv weight squeezed), bias as (Cout, 1),
    uniform(-1/sqrt(fan_in), 1/sqrt(fan_in))."""
    h = 2 * f_dim
    ks = jax.random.split(key, 6)

    def u(k, shape, fan_in):
        bound = 1.0 / jnp.sqrt(float(fan_in))
        return jax.random.uniform(k, shape, dtype, minval=-bound, maxval=bound)

    w1 = u(ks[0], (h, f_dim), f_dim)
    b1 = u(ks[1], (h, 1), f_dim)
    w2 = u(ks[2], (h, h), h)
    b2 = u(ks[3], (h, 1), h)
    w3 = u(ks[4], (f_dim, h), h)
    b3 = u(ks[5], (f_dim, 1), h)
    return (w1, b1, w2, b2, w3, b3)


def reference_forward(x, params):
    """Pure-JAX reference (same math, no Pallas)."""
    w1, b1, w2, b2, w3, b3 = params
    N, C, H, W = x.shape
    xf = x.reshape(N, C, H * W).astype(jnp.float32)
    h1 = jnp.maximum(jnp.einsum('oc,ncl->nol', w1, xf) + b1[None], 0.0)
    h2 = jnp.maximum(jnp.einsum('oh,nhl->nol', w2, h1) + b2[None], 0.0)
    y = jnp.einsum('oh,nhl->nol', w3, h2) + b3[None]
    return y.reshape(N, C, H, W).astype(x.dtype)


if __name__ == "__main__":
    f_dim = 4
    N, H, W = 2, 16, 16

    key = jax.random.PRNGKey(0)
    kx, kp = jax.random.split(key)
    x = jax.random.normal(kx, (N, f_dim, H, W), dtype=jnp.float32)  # NCHW
    params = init_params(kp, f_dim)

    y, none_out = mlp_forward((x,), flag=None, params=params)
    y = jax.block_until_ready(y)

    assert none_out is None
    assert y.shape == (N, f_dim, H, W), y.shape

    y_ref = reference_forward(x, params)
    err = float(jnp.max(jnp.abs(y - y_ref)))
    assert jnp.allclose(y, y_ref, atol=1e-5, rtol=1e-5), err

    print("KERNEL_OK")
</pallas_src>

<mosaic_0001>
module attributes {stable_mosaic.version = 11 : i64} {
  func.func @kernel(%arg0: i32, %arg1: i32, %arg2: memref<1x4x256xf32, #tpu.memory_space<vmem>>, %arg3: memref<8x4xf32, #tpu.memory_space<vmem>>, %arg4: memref<8x1xf32, #tpu.memory_space<vmem>>, %arg5: memref<8x8xf32, #tpu.memory_space<vmem>>, %arg6: memref<8x1xf32, #tpu.memory_space<vmem>>, %arg7: memref<4x8xf32, #tpu.memory_space<vmem>>, %arg8: memref<4x1xf32, #tpu.memory_space<vmem>>, %arg9: memref<1x4x256xf32, #tpu.memory_space<vmem>>) attributes {dimension_semantics = [#tpu.dimension_semantics<parallel>, #tpu.dimension_semantics<parallel>], iteration_bounds = array<i64: 2, 1>, scalar_prefetch = 0 : i64, scratch_operands = 0 : i64, tpu.core_type = #tpu.core_type<tc>, window_params = [{transform_indices = @transform_0, window_bounds = array<i64: 1, 4, 256>}, {pipeline_mode = #tpu.pipeline_mode<synchronous>, transform_indices = @transform_1, window_bounds = array<i64: 8, 4>}, {pipeline_mode = #tpu.pipeline_mode<synchronous>, transform_indices = @transform_2, window_bounds = array<i64: 8, 1>}, {pipeline_mode = #tpu.pipeline_mode<synchronous>, transform_indices = @transform_3, window_bounds = array<i64: 8, 8>}, {pipeline_mode = #tpu.pipeline_mode<synchronous>, transform_indices = @transform_4, window_bounds = array<i64: 8, 1>}, {pipeline_mode = #tpu.pipeline_mode<synchronous>, transform_indices = @transform_5, window_bounds = array<i64: 4, 8>}, {pipeline_mode = #tpu.pipeline_mode<synchronous>, transform_indices = @transform_6, window_bounds = array<i64: 4, 1>}, {transform_indices = @transform_7, window_bounds = array<i64: 1, 4, 256>}]} {
    %c0 = arith.constant 0 : index
    %c0_0 = arith.constant 0 : index
    %c0_1 = arith.constant 0 : index
    %0 = vector.load %arg2[%c0, %c0_0, %c0_1] : memref<1x4x256xf32, #tpu.memory_space<vmem>>, vector<1x4x256xf32>
    %1 = vector.shape_cast %0 : vector<1x4x256xf32> to vector<4x256xf32>
    %c0_2 = arith.constant 0 : index
    %c0_3 = arith.constant 0 : index
    %2 = vector.load %arg3[%c0_2, %c0_3] : memref<8x4xf32, #tpu.memory_space<vmem>>, vector<8x4xf32>
    %3 = vector.extract_strided_slice %2 {offsets = [0, 0], sizes = [8, 1], strides = [1, 1]} : vector<8x4xf32> to vector<8x1xf32>
    %4 = vector.extract_strided_slice %1 {offsets = [0, 0], sizes = [1, 256], strides = [1, 1]} : vector<4x256xf32> to vector<1x256xf32>
    %5 = vector.broadcast %3 : vector<8x1xf32> to vector<8x256xf32>
    %6 = vector.broadcast %4 : vector<1x256xf32> to vector<8x256xf32>
    %7 = arith.mulf %5, %6 : vector<8x256xf32>
    %8 = vector.extract_strided_slice %2 {offsets = [0, 1], sizes = [8, 1], strides = [1, 1]} : vector<8x4xf32> to vector<8x1xf32>
    %9 = vector.extract_strided_slice %1 {offsets = [1, 0], sizes = [1, 256], strides = [1, 1]} : vector<4x256xf32> to vector<1x256xf32>
    %10 = vector.broadcast %8 : vector<8x1xf32> to vector<8x256xf32>
    %11 = vector.broadcast %9 : vector<1x256xf32> to vector<8x256xf32>
    %12 = arith.mulf %10, %11 : vector<8x256xf32>
    %13 = arith.addf %7, %12 : vector<8x256xf32>
    %14 = vector.extract_strided_slice %2 {offsets = [0, 2], sizes = [8, 1], strides = [1, 1]} : vector<8x4xf32> to vector<8x1xf32>
    %15 = vector.extract_strided_slice %1 {offsets = [2, 0], sizes = [1, 256], strides = [1, 1]} : vector<4x256xf32> to vector<1x256xf32>
    %16 = vector.broadcast %14 : vector<8x1xf32> to vector<8x256xf32>
    %17 = vector.broadcast %15 : vector<1x256xf32> to vector<8x256xf32>
    %18 = arith.mulf %16, %17 : vector<8x256xf32>
    %19 = arith.addf %13, %18 : vector<8x256xf32>
    %20 = vector.extract_strided_slice %2 {offsets = [0, 3], sizes = [8, 1], strides = [1, 1]} : vector<8x4xf32> to vector<8x1xf32>
    %21 = vector.extract_strided_slice %1 {offsets = [3, 0], sizes = [1, 256], strides = [1, 1]} : vector<4x256xf32> to vector<1x256xf32>
    %22 = vector.broadcast %20 : vector<8x1xf32> to vector<8x256xf32>
    %23 = vector.broadcast %21 : vector<1x256xf32> to vector<8x256xf32>
    %24 = arith.mulf %22, %23 : vector<8x256xf32>
    %25 = arith.addf %19, %24 : vector<8x256xf32>
    %c0_4 = arith.constant 0 : index
    %c0_5 = arith.constant 0 : index
    %26 = vector.load %arg4[%c0_4, %c0_5] : memref<8x1xf32, #tpu.memory_space<vmem>>, vector<8x1xf32>
    %27 = vector.broadcast %26 : vector<8x1xf32> to vector<8x256xf32>
    %28 = arith.addf %25, %27 : vector<8x256xf32>
    %cst = arith.constant 0.000000e+00 : f32
    %29 = vector.broadcast %cst : f32 to vector<8x256xf32>
    %30 = arith.maximumf %28, %29 : vector<8x256xf32>
    %c0_6 = arith.constant 0 : index
    %c0_7 = arith.constant 0 : index
    %31 = vector.load %arg5[%c0_6, %c0_7] : memref<8x8xf32, #tpu.memory_space<vmem>>, vector<8x8xf32>
    %32 = vector.extract_strided_slice %31 {offsets = [0, 0], sizes = [8, 1], strides = [1, 1]} : vector<8x8xf32> to vector<8x1xf32>
    %33 = vector.extract_strided_slice %30 {offsets = [0, 0], sizes = [1, 256], strides = [1, 1]} : vector<8x256xf32> to vector<1x256xf32>
    %34 = vector.broadcast %32 : vector<8x1xf32> to vector<8x256xf32>
    %35 = vector.broadcast %33 : vector<1x256xf32> to vector<8x256xf32>
    %36 = arith.mulf %34, %35 : vector<8x256xf32>
    %37 = vector.extract_strided_slice %31 {offsets = [0, 1], sizes = [8, 1], strides = [1, 1]} : vector<8x8xf32> to vector<8x1xf32>
    %38 = vector.extract_strided_slice %30 {offsets = [1, 0], sizes = [1, 256], strides = [1, 1]} : vector<8x256xf32> to vector<1x256xf32>
    %39 = vector.broadcast %37 : vector<8x1xf32> to vector<8x256xf32>
    %40 = vector.broadcast %38 : vector<1x256xf32> to vector<8x256xf32>
    %41 = arith.mulf %39, %40 : vector<8x256xf32>
    %42 = arith.addf %36, %41 : vector<8x256xf32>
    %43 = vector.extract_strided_slice %31 {offsets = [0, 2], sizes = [8, 1], strides = [1, 1]} : vector<8x8xf32> to vector<8x1xf32>
    %44 = vector.extract_strided_slice %30 {offsets = [2, 0], sizes = [1, 256], strides = [1, 1]} : vector<8x256xf32> to vector<1x256xf32>
    %45 = vector.broadcast %43 : vector<8x1xf32> to vector<8x256xf32>
    %46 = vector.broadcast %44 : vector<1x256xf32> to vector<8x256xf32>
    %47 = arith.mulf %45, %46 : vector<8x256xf32>
    %48 = arith.addf %42, %47 : vector<8x256xf32>
    %49 = vector.extract_strided_slice %31 {offsets = [0, 3], sizes = [8, 1], strides = [1, 1]} : vector<8x8xf32> to vector<8x1xf32>
    %50 = vector.extract_strided_slice %30 {offsets = [3, 0], sizes = [1, 256], strides = [1, 1]} : vector<8x256xf32> to vector<1x256xf32>
    %51 = vector.broadcast %49 : vector<8x1xf32> to vector<8x256xf32>
    %52 = vector.broadcast %50 : vector<1x256xf32> to vector<8x256xf32>
    %53 = arith.mulf %51, %52 : vector<8x256xf32>
    %54 = arith.addf %48, %53 : vector<8x256xf32>
    %55 = vector.extract_strided_slice %31 {offsets = [0, 4], sizes = [8, 1], strides = [1, 1]} : vector<8x8xf32> to vector<8x1xf32>
    %56 = vector.extract_strided_slice %30 {offsets = [4, 0], sizes = [1, 256], strides = [1, 1]} : vector<8x256xf32> to vector<1x256xf32>
    %57 = vector.broadcast %55 : vector<8x1xf32> to vector<8x256xf32>
    %58 = vector.broadcast %56 : vector<1x256xf32> to vector<8x256xf32>
    %59 = arith.mulf %57, %58 : vector<8x256xf32>
    %60 = arith.addf %54, %59 : vector<8x256xf32>
    %61 = vector.extract_strided_slice %31 {offsets = [0, 5], sizes = [8, 1], strides = [1, 1]} : vector<8x8xf32> to vector<8x1xf32>
    %62 = vector.extract_strided_slice %30 {offsets = [5, 0], sizes = [1, 256], strides = [1, 1]} : vector<8x256xf32> to vector<1x256xf32>
    %63 = vector.broadcast %61 : vector<8x1xf32> to vector<8x256xf32>
    %64 = vector.broadcast %62 : vector<1x256xf32> to vector<8x256xf32>
    %65 = arith.mulf %63, %64 : vector<8x256xf32>
    %66 = arith.addf %60, %65 : vector<8x256xf32>
    %67 = vector.extract_strided_slice %31 {offsets = [0, 6], sizes = [8, 1], strides = [1, 1]} : vector<8x8xf32> to vector<8x1xf32>
    %68 = vector.extract_strided_slice %30 {offsets = [6, 0], sizes = [1, 256], strides = [1, 1]} : vector<8x256xf32> to vector<1x256xf32>
    %69 = vector.broadcast %67 : vector<8x1xf32> to vector<8x256xf32>
    %70 = vector.broadcast %68 : vector<1x256xf32> to vector<8x256xf32>
    %71 = arith.mulf %69, %70 : vector<8x256xf32>
    %72 = arith.addf %66, %71 : vector<8x256xf32>
    %73 = vector.extract_strided_slice %31 {offsets = [0, 7], sizes = [8, 1], strides = [1, 1]} : vector<8x8xf32> to vector<8x1xf32>
    %74 = vector.extract_strided_slice %30 {offsets = [7, 0], sizes = [1, 256], strides = [1, 1]} : vector<8x256xf32> to vector<1x256xf32>
    %75 = vector.broadcast %73 : vector<8x1xf32> to vector<8x256xf32>
    %76 = vector.broadcast %74 : vector<1x256xf32> to vector<8x256xf32>
    %77 = arith.mulf %75, %76 : vector<8x256xf32>
    %78 = arith.addf %72, %77 : vector<8x256xf32>
    %c0_8 = arith.constant 0 : index
    %c0_9 = arith.constant 0 : index
    %79 = vector.load %arg6[%c0_8, %c0_9] : memref<8x1xf32, #tpu.memory_space<vmem>>, vector<8x1xf32>
    %80 = vector.broadcast %79 : vector<8x1xf32> to vector<8x256xf32>
    %81 = arith.addf %78, %80 : vector<8x256xf32>
    %cst_10 = arith.constant 0.000000e+00 : f32
    %82 = vector.broadcast %cst_10 : f32 to vector<8x256xf32>
    %83 = arith.maximumf %81, %82 : vector<8x256xf32>
    %c0_11 = arith.constant 0 : index
    %c0_12 = arith.constant 0 : index
    %84 = vector.load %arg7[%c0_11, %c0_12] : memref<4x8xf32, #tpu.memory_space<vmem>>, vector<4x8xf32>
    %85 = vector.extract_strided_slice %84 {offsets = [0, 0], sizes = [4, 1], strides = [1, 1]} : vector<4x8xf32> to vector<4x1xf32>
    %86 = vector.extract_strided_slice %83 {offsets = [0, 0], sizes = [1, 256], strides = [1, 1]} : vector<8x256xf32> to vector<1x256xf32>
    %87 = vector.broadcast %85 : vector<4x1xf32> to vector<4x256xf32>
    %88 = vector.broadcast %86 : vector<1x256xf32> to vector<4x256xf32>
    %89 = arith.mulf %87, %88 : vector<4x256xf32>
    %90 = vector.extract_strided_slice %84 {offsets = [0, 1], sizes = [4, 1], strides = [1, 1]} : vector<4x8xf32> to vector<4x1xf32>
    %91 = vector.extract_strided_slice %83 {offsets = [1, 0], sizes = [1, 256], strides = [1, 1]} : vector<8x256xf32> to vector<1x256xf32>
    %92 = vector.broadcast %90 : vector<4x1xf32> to vector<4x256xf32>
    %93 = vector.broadcast %91 : vector<1x256xf32> to vector<4x256xf32>
    %94 = arith.mulf %92, %93 : vector<4x256xf32>
    %95 = arith.addf %89, %94 : vector<4x256xf32>
    %96 = vector.extract_strided_slice %84 {offsets = [0, 2], sizes = [4, 1], strides = [1, 1]} : vector<4x8xf32> to vector<4x1xf32>
    %97 = vector.extract_strided_slice %83 {offsets = [2, 0], sizes = [1, 256], strides = [1, 1]} : vector<8x256xf32> to vector<1x256xf32>
    %98 = vector.broadcast %96 : vector<4x1xf32> to vector<4x256xf32>
    %99 = vector.broadcast %97 : vector<1x256xf32> to vector<4x256xf32>
    %100 = arith.mulf %98, %99 : vector<4x256xf32>
    %101 = arith.addf %95, %100 : vector<4x256xf32>
    %102 = vector.extract_strided_slice %84 {offsets = [0, 3], sizes = [4, 1], strides = [1, 1]} : vector<4x8xf32> to vector<4x1xf32>
    %103 = vector.extract_strided_slice %83 {offsets = [3, 0], sizes = [1, 256], strides = [1, 1]} : vector<8x256xf32> to vector<1x256xf32>
    %104 = vector.broadcast %102 : vector<4x1xf32> to vector<4x256xf32>
    %105 = vector.broadcast %103 : vector<1x256xf32> to vector<4x256xf32>
    %106 = arith.mulf %104, %105 : vector<4x256xf32>
    %107 = arith.addf %101, %106 : vector<4x256xf32>
    %108 = vector.extract_strided_slice %84 {offsets = [0, 4], sizes = [4, 1], strides = [1, 1]} : vector<4x8xf32> to vector<4x1xf32>
    %109 = vector.extract_strided_slice %83 {offsets = [4, 0], sizes = [1, 256], strides = [1, 1]} : vector<8x256xf32> to vector<1x256xf32>
    %110 = vector.broadcast %108 : vector<4x1xf32> to vector<4x256xf32>
    %111 = vector.broadcast %109 : vector<1x256xf32> to vector<4x256xf32>
    %112 = arith.mulf %110, %111 : vector<4x256xf32>
    %113 = arith.addf %107, %112 : vector<4x256xf32>
    %114 = vector.extract_strided_slice %84 {offsets = [0, 5], sizes = [4, 1], strides = [1, 1]} : vector<4x8xf32> to vector<4x1xf32>
    %115 = vector.extract_strided_slice %83 {offsets = [5, 0], sizes = [1, 256], strides = [1, 1]} : vector<8x256xf32> to vector<1x256xf32>
    %116 = vector.broadcast %114 : vector<4x1xf32> to vector<4x256xf32>
    %117 = vector.broadcast %115 : vector<1x256xf32> to vector<4x256xf32>
    %118 = arith.mulf %116, %117 : vector<4x256xf32>
    %119 = arith.addf %113, %118 : vector<4x256xf32>
    %120 = vector.extract_strided_slice %84 {offsets = [0, 6], sizes = [4, 1], strides = [1, 1]} : vector<4x8xf32> to vector<4x1xf32>
    %121 = vector.extract_strided_slice %83 {offsets = [6, 0], sizes = [1, 256], strides = [1, 1]} : vector<8x256xf32> to vector<1x256xf32>
    %122 = vector.broadcast %120 : vector<4x1xf32> to vector<4x256xf32>
    %123 = vector.broadcast %121 : vector<1x256xf32> to vector<4x256xf32>
    %124 = arith.mulf %122, %123 : vector<4x256xf32>
    %125 = arith.addf %119, %124 : vector<4x256xf32>
    %126 = vector.extract_strided_slice %84 {offsets = [0, 7], sizes = [4, 1], strides = [1, 1]} : vector<4x8xf32> to vector<4x1xf32>
    %127 = vector.extract_strided_slice %83 {offsets = [7, 0], sizes = [1, 256], strides = [1, 1]} : vector<8x256xf32> to vector<1x256xf32>
    %128 = vector.broadcast %126 : vector<4x1xf32> to vector<4x256xf32>
    %129 = vector.broadcast %127 : vector<1x256xf32> to vector<4x256xf32>
    %130 = arith.mulf %128, %129 : vector<4x256xf32>
    %131 = arith.addf %125, %130 : vector<4x256xf32>
    %c0_13 = arith.constant 0 : index
    %c0_14 = arith.constant 0 : index
    %132 = vector.load %arg8[%c0_13, %c0_14] : memref<4x1xf32, #tpu.memory_space<vmem>>, vector<4x1xf32>
    %133 = vector.broadcast %132 : vector<4x1xf32> to vector<4x256xf32>
    %134 = arith.addf %131, %133 : vector<4x256xf32>
    %c0_15 = arith.constant 0 : index
    %c0_16 = arith.constant 0 : index
    %c0_17 = arith.constant 0 : index
    %135 = vector.load %arg9[%c0_15, %c0_16, %c0_17] : memref<1x4x256xf32, #tpu.memory_space<vmem>>, vector<1x4x256xf32>
    %136 = vector.shape_cast %135 : vector<1x4x256xf32> to vector<4x256xf32>
    %137 = vector.shape_cast %134 : vector<4x256xf32> to vector<1x4x256xf32>
    tpu.vector_store %arg9[%c0_15, %c0_16, %c0_17], %137 {strides = array<i32>} : memref<1x4x256xf32, #tpu.memory_space<vmem>>, vector<1x4x256xf32>,
    return
  }
  func.func @transform_0(%arg0: i32, %arg1: i32) -> (i32, i32, i32) {
    %c0_i32 = arith.constant 0 : i32
    %c0_i32_0 = arith.constant 0 : i32
    return %arg0, %c0_i32, %arg1 : i32, i32, i32
  }
  func.func @transform_1(%arg0: i32, %arg1: i32) -> (i32, i32) {
    %c0_i32 = arith.constant 0 : i32
    %c0_i32_0 = arith.constant 0 : i32
    %c0_i32_1 = arith.constant 0 : i32
    return %c0_i32, %c0_i32_0 : i32, i32
  }
  func.func @transform_2(%arg0: i32, %arg1: i32) -> (i32, i32) {
    %c0_i32 = arith.constant 0 : i32
    %c0_i32_0 = arith.constant 0 : i32
    %c0_i32_1 = arith.constant 0 : i32
    return %c0_i32, %c0_i32_0 : i32, i32
  }
  func.func @transform_3(%arg0: i32, %arg1: i32) -> (i32, i32) {
    %c0_i32 = arith.constant 0 : i32
    %c0_i32_0 = arith.constant 0 : i32
    %c0_i32_1 = arith.constant 0 : i32
    return %c0_i32, %c0_i32_0 : i32, i32
  }
  func.func @transform_4(%arg0: i32, %arg1: i32) -> (i32, i32) {
    %c0_i32 = arith.constant 0 : i32
    %c0_i32_0 = arith.constant 0 : i32
    %c0_i32_1 = arith.constant 0 : i32
    return %c0_i32, %c0_i32_0 : i32, i32
  }
  func.func @transform_5(%arg0: i32, %arg1: i32) -> (i32, i32) {
    %c0_i32 = arith.constant 0 : i32
    %c0_i32_0 = arith.constant 0 : i32
    %c0_i32_1 = arith.constant 0 : i32
    return %c0_i32, %c0_i32_0 : i32, i32
  }
  func.func @transform_6(%arg0: i32, %arg1: i32) -> (i32, i32) {
    %c0_i32 = arith.constant 0 : i32
    %c0_i32_0 = arith.constant 0 : i32
    %c0_i32_1 = arith.constant 0 : i32
    return %c0_i32, %c0_i32_0 : i32, i32
  }
  func.func @transform_7(%arg0: i32, %arg1: i32) -> (i32, i32, i32) {
    %c0_i32 = arith.constant 0 : i32
    %c0_i32_0 = arith.constant 0 : i32
    return %arg0, %c0_i32, %arg1 : i32, i32, i32
  }
}

module attributes {stable_mosaic.version = 11 : i64} {
  func.func @kernel(%arg0: i32, %arg1: i32, %arg2: memref<1x4x256xf32, #tpu.memory_space<vmem>>, %arg3: memref<8x4xf32, #tpu.memory_space<vmem>>, %arg4: memref<8x1xf32, #tpu.memory_space<vmem>>, %arg5: memref<8x8xf32, #tpu.memory_space<vmem>>, %arg6: memref<8x1xf32, #tpu.memory_space<vmem>>, %arg7: memref<4x8xf32, #tpu.memory_space<vmem>>, %arg8: memref<4x1xf32, #tpu.memory_space<vmem>>, %arg9: memref<1x4x256xf32, #tpu.memory_space<vmem>>) attributes {dimension_semantics = [#tpu.dimension_semantics<parallel>, #tpu.dimension_semantics<parallel>], iteration_bounds = array<i64: 2, 1>, scalar_prefetch = 0 : i64, scratch_operands = 0 : i64, tpu.core_type = #tpu.core_type<tc>, window_params = [{transform_indices = @transform_0, window_bounds = array<i64: 1, 4, 256>}, {pipeline_mode = #tpu.pipeline_mode<synchronous>, transform_indices = @transform_1, window_bounds = array<i64: 8, 4>}, {pipeline_mode = #tpu.pipeline_mode<synchronous>, transform_indices = @transform_2, window_bounds = array<i64: 8, 1>}, {pipeline_mode = #tpu.pipeline_mode<synchronous>, transform_indices = @transform_3, window_bounds = array<i64: 8, 8>}, {pipeline_mode = #tpu.pipeline_mode<synchronous>, transform_indices = @transform_4, window_bounds = array<i64: 8, 1>}, {pipeline_mode = #tpu.pipeline_mode<synchronous>, transform_indices = @transform_5, window_bounds = array<i64: 4, 8>}, {pipeline_mode = #tpu.pipeline_mode<synchronous>, transform_indices = @transform_6, window_bounds = array<i64: 4, 1>}, {transform_indices = @transform_7, window_bounds = array<i64: 1, 4, 256>}]} {
    %c0 = arith.constant 0 : index
    %c0_0 = arith.constant 0 : index
    %c0_1 = arith.constant 0 : index
    %0 = vector.load %arg2[%c0, %c0_0, %c0_1] : memref<1x4x256xf32, #tpu.memory_space<vmem>>, vector<1x4x256xf32>
    %1 = vector.shape_cast %0 : vector<1x4x256xf32> to vector<4x256xf32>
    %c0_2 = arith.constant 0 : index
    %c0_3 = arith.constant 0 : index
    %2 = vector.load %arg3[%c0_2, %c0_3] : memref<8x4xf32, #tpu.memory_space<vmem>>, vector<8x4xf32>
    %3 = vector.extract_strided_slice %2 {offsets = [0, 0], sizes = [8, 1], strides = [1, 1]} : vector<8x4xf32> to vector<8x1xf32>
    %4 = vector.extract_strided_slice %1 {offsets = [0, 0], sizes = [1, 256], strides = [1, 1]} : vector<4x256xf32> to vector<1x256xf32>
    %5 = vector.broadcast %3 : vector<8x1xf32> to vector<8x256xf32>
    %6 = vector.broadcast %4 : vector<1x256xf32> to vector<8x256xf32>
    %7 = arith.mulf %5, %6 : vector<8x256xf32>
    %8 = vector.extract_strided_slice %2 {offsets = [0, 1], sizes = [8, 1], strides = [1, 1]} : vector<8x4xf32> to vector<8x1xf32>
    %9 = vector.extract_strided_slice %1 {offsets = [1, 0], sizes = [1, 256], strides = [1, 1]} : vector<4x256xf32> to vector<1x256xf32>
    %10 = vector.broadcast %8 : vector<8x1xf32> to vector<8x256xf32>
    %11 = vector.broadcast %9 : vector<1x256xf32> to vector<8x256xf32>
    %12 = arith.mulf %10, %11 : vector<8x256xf32>
    %13 = arith.addf %7, %12 : vector<8x256xf32>
    %14 = vector.extract_strided_slice %2 {offsets = [0, 2], sizes = [8, 1], strides = [1, 1]} : vector<8x4xf32> to vector<8x1xf32>
    %15 = vector.extract_strided_slice %1 {offsets = [2, 0], sizes = [1, 256], strides = [1, 1]} : vector<4x256xf32> to vector<1x256xf32>
    %16 = vector.broadcast %14 : vector<8x1xf32> to vector<8x256xf32>
    %17 = vector.broadcast %15 : vector<1x256xf32> to vector<8x256xf32>
    %18 = arith.mulf %16, %17 : vector<8x256xf32>
    %19 = arith.addf %13, %18 : vector<8x256xf32>
    %20 = vector.extract_strided_slice %2 {offsets = [0, 3], sizes = [8, 1], strides = [1, 1]} : vector<8x4xf32> to vector<8x1xf32>
    %21 = vector.extract_strided_slice %1 {offsets = [3, 0], sizes = [1, 256], strides = [1, 1]} : vector<4x256xf32> to vector<1x256xf32>
    %22 = vector.broadcast %20 : vector<8x1xf32> to vector<8x256xf32>
    %23 = vector.broadcast %21 : vector<1x256xf32> to vector<8x256xf32>
    %24 = arith.mulf %22, %23 : vector<8x256xf32>
    %25 = arith.addf %19, %24 : vector<8x256xf32>
    %c0_4 = arith.constant 0 : index
    %c0_5 = arith.constant 0 : index
    %26 = vector.load %arg4[%c0_4, %c0_5] : memref<8x1xf32, #tpu.memory_space<vmem>>, vector<8x1xf32>
    %27 = vector.broadcast %26 : vector<8x1xf32> to vector<8x256xf32>
    %28 = arith.addf %25, %27 : vector<8x256xf32>
    %cst = arith.constant 0.000000e+00 : f32
    %29 = vector.broadcast %cst : f32 to vector<8x256xf32>
    %30 = arith.maximumf %28, %29 : vector<8x256xf32>
    %c0_6 = arith.constant 0 : index
    %c0_7 = arith.constant 0 : index
    %31 = vector.load %arg5[%c0_6, %c0_7] : memref<8x8xf32, #tpu.memory_space<vmem>>, vector<8x8xf32>
    %32 = vector.extract_strided_slice %31 {offsets = [0, 0], sizes = [8, 1], strides = [1, 1]} : vector<8x8xf32> to vector<8x1xf32>
    %33 = vector.extract_strided_slice %30 {offsets = [0, 0], sizes = [1, 256], strides = [1, 1]} : vector<8x256xf32> to vector<1x256xf32>
    %34 = vector.broadcast %32 : vector<8x1xf32> to vector<8x256xf32>
    %35 = vector.broadcast %33 : vector<1x256xf32> to vector<8x256xf32>
    %36 = arith.mulf %34, %35 : vector<8x256xf32>
    %37 = vector.extract_strided_slice %31 {offsets = [0, 1], sizes = [8, 1], strides = [1, 1]} : vector<8x8xf32> to vector<8x1xf32>
    %38 = vector.extract_strided_slice %30 {offsets = [1, 0], sizes = [1, 256], strides = [1, 1]} : vector<8x256xf32> to vector<1x256xf32>
    %39 = vector.broadcast %37 : vector<8x1xf32> to vector<8x256xf32>
    %40 = vector.broadcast %38 : vector<1x256xf32> to vector<8x256xf32>
    %41 = arith.mulf %39, %40 : vector<8x256xf32>
    %42 = arith.addf %36, %41 : vector<8x256xf32>
    %43 = vector.extract_strided_slice %31 {offsets = [0, 2], sizes = [8, 1], strides = [1, 1]} : vector<8x8xf32> to vector<8x1xf32>
    %44 = vector.extract_strided_slice %30 {offsets = [2, 0], sizes = [1, 256], strides = [1, 1]} : vector<8x256xf32> to vector<1x256xf32>
    %45 = vector.broadcast %43 : vector<8x1xf32> to vector<8x256xf32>
    %46 = vector.broadcast %44 : vector<1x256xf32> to vector<8x256xf32>
    %47 = arith.mulf %45, %46 : vector<8x256xf32>
    %48 = arith.addf %42, %47 : vector<8x256xf32>
    %49 = vector.extract_strided_slice %31 {offsets = [0, 3], sizes = [8, 1], strides = [1, 1]} : vector<8x8xf32> to vector<8x1xf32>
    %50 = vector.extract_strided_slice %30 {offsets = [3, 0], sizes = [1, 256], strides = [1, 1]} : vector<8x256xf32> to vector<1x256xf32>
    %51 = vector.broadcast %49 : vector<8x1xf32> to vector<8x256xf32>
    %52 = vector.broadcast %50 : vector<1x256xf32> to vector<8x256xf32>
    %53 = arith.mulf %51, %52 : vector<8x256xf32>
    %54 = arith.addf %48, %53 : vector<8x256xf32>
    %55 = vector.extract_strided_slice %31 {offsets = [0, 4], sizes = [8, 1], strides = [1, 1]} : vector<8x8xf32> to vector<8x1xf32>
    %56 = vector.extract_strided_slice %30 {offsets = [4, 0], sizes = [1, 256], strides = [1, 1]} : vector<8x256xf32> to vector<1x256xf32>
    %57 = vector.broadcast %55 : vector<8x1xf32> to vector<8x256xf32>
    %58 = vector.broadcast %56 : vector<1x256xf32> to vector<8x256xf32>
    %59 = arith.mulf %57, %58 : vector<8x256xf32>
    %60 = arith.addf %54, %59 : vector<8x256xf32>
    %61 = vector.extract_strided_slice %31 {offsets = [0, 5], sizes = [8, 1], strides = [1, 1]} : vector<8x8xf32> to vector<8x1xf32>
    %62 = vector.extract_strided_slice %30 {offsets = [5, 0], sizes = [1, 256], strides = [1, 1]} : vector<8x256xf32> to vector<1x256xf32>
    %63 = vector.broadcast %61 : vector<8x1xf32> to vector<8x256xf32>
    %64 = vector.broadcast %62 : vector<1x256xf32> to vector<8x256xf32>
    %65 = arith.mulf %63, %64 : vector<8x256xf32>
    %66 = arith.addf %60, %65 : vector<8x256xf32>
    %67 = vector.extract_strided_slice %31 {offsets = [0, 6], sizes = [8, 1], strides = [1, 1]} : vector<8x8xf32> to vector<8x1xf32>
    %68 = vector.extract_strided_slice %30 {offsets = [6, 0], sizes = [1, 256], strides = [1, 1]} : vector<8x256xf32> to vector<1x256xf32>
    %69 = vector.broadcast %67 : vector<8x1xf32> to vector<8x256xf32>
    %70 = vector.broadcast %68 : vector<1x256xf32> to vector<8x256xf32>
    %71 = arith.mulf %69, %70 : vector<8x256xf32>
    %72 = arith.addf %66, %71 : vector<8x256xf32>
    %73 = vector.extract_strided_slice %31 {offsets = [0, 7], sizes = [8, 1], strides = [1, 1]} : vector<8x8xf32> to vector<8x1xf32>
    %74 = vector.extract_strided_slice %30 {offsets = [7, 0], sizes = [1, 256], strides = [1, 1]} : vector<8x256xf32> to vector<1x256xf32>
    %75 = vector.broadcast %73 : vector<8x1xf32> to vector<8x256xf32>
    %76 = vector.broadcast %74 : vector<1x256xf32> to vector<8x256xf32>
    %77 = arith.mulf %75, %76 : vector<8x256xf32>
    %78 = arith.addf %72, %77 : vector<8x256xf32>
    %c0_8 = arith.constant 0 : index
    %c0_9 = arith.constant 0 : index
    %79 = vector.load %arg6[%c0_8, %c0_9] : memref<8x1xf32, #tpu.memory_space<vmem>>, vector<8x1xf32>
    %80 = vector.broadcast %79 : vector<8x1xf32> to vector<8x256xf32>
    %81 = arith.addf %78, %80 : vector<8x256xf32>
    %cst_10 = arith.constant 0.000000e+00 : f32
    %82 = vector.broadcast %cst_10 : f32 to vector<8x256xf32>
    %83 = arith.maximumf %81, %82 : vector<8x256xf32>
    %c0_11 = arith.constant 0 : index
    %c0_12 = arith.constant 0 : index
    %84 = vector.load %arg7[%c0_11, %c0_12] : memref<4x8xf32, #tpu.memory_space<vmem>>, vector<4x8xf32>
    %85 = vector.extract_strided_slice %84 {offsets = [0, 0], sizes = [4, 1], strides = [1, 1]} : vector<4x8xf32> to vector<4x1xf32>
    %86 = vector.extract_strided_slice %83 {offsets = [0, 0], sizes = [1, 256], strides = [1, 1]} : vector<8x256xf32> to vector<1x256xf32>
    %87 = vector.broadcast %85 : vector<4x1xf32> to vector<4x256xf32>
    %88 = vector.broadcast %86 : vector<1x256xf32> to vector<4x256xf32>
    %89 = arith.mulf %87, %88 : vector<4x256xf32>
    %90 = vector.extract_strided_slice %84 {offsets = [0, 1], sizes = [4, 1], strides = [1, 1]} : vector<4x8xf32> to vector<4x1xf32>
    %91 = vector.extract_strided_slice %83 {offsets = [1, 0], sizes = [1, 256], strides = [1, 1]} : vector<8x256xf32> to vector<1x256xf32>
    %92 = vector.broadcast %90 : vector<4x1xf32> to vector<4x256xf32>
    %93 = vector.broadcast %91 : vector<1x256xf32> to vector<4x256xf32>
    %94 = arith.mulf %92, %93 : vector<4x256xf32>
    %95 = arith.addf %89, %94 : vector<4x256xf32>
    %96 = vector.extract_strided_slice %84 {offsets = [0, 2], sizes = [4, 1], strides = [1, 1]} : vector<4x8xf32> to vector<4x1xf32>
    %97 = vector.extract_strided_slice %83 {offsets = [2, 0], sizes = [1, 256], strides = [1, 1]} : vector<8x256xf32> to vector<1x256xf32>
    %98 = vector.broadcast %96 : vector<4x1xf32> to vector<4x256xf32>
    %99 = vector.broadcast %97 : vector<1x256xf32> to vector<4x256xf32>
    %100 = arith.mulf %98, %99 : vector<4x256xf32>
    %101 = arith.addf %95, %100 : vector<4x256xf32>
    %102 = vector.extract_strided_slice %84 {offsets = [0, 3], sizes = [4, 1], strides = [1, 1]} : vector<4x8xf32> to vector<4x1xf32>
    %103 = vector.extract_strided_slice %83 {offsets = [3, 0], sizes = [1, 256], strides = [1, 1]} : vector<8x256xf32> to vector<1x256xf32>
    %104 = vector.broadcast %102 : vector<4x1xf32> to vector<4x256xf32>
    %105 = vector.broadcast %103 : vector<1x256xf32> to vector<4x256xf32>
    %106 = arith.mulf %104, %105 : vector<4x256xf32>
    %107 = arith.addf %101, %106 : vector<4x256xf32>
    %108 = vector.extract_strided_slice %84 {offsets = [0, 4], sizes = [4, 1], strides = [1, 1]} : vector<4x8xf32> to vector<4x1xf32>
    %109 = vector.extract_strided_slice %83 {offsets = [4, 0], sizes = [1, 256], strides = [1, 1]} : vector<8x256xf32> to vector<1x256xf32>
    %110 = vector.broadcast %108 : vector<4x1xf32> to vector<4x256xf32>
    %111 = vector.broadcast %109 : vector<1x256xf32> to vector<4x256xf32>
    %112 = arith.mulf %110, %111 : vector<4x256xf32>
    %113 = arith.addf %107, %112 : vector<4x256xf32>
    %114 = vector.extract_strided_slice %84 {offsets = [0, 5], sizes = [4, 1], strides = [1, 1]} : vector<4x8xf32> to vector<4x1xf32>
    %115 = vector.extract_strided_slice %83 {offsets = [5, 0], sizes = [1, 256], strides = [1, 1]} : vector<8x256xf32> to vector<1x256xf32>
    %116 = vector.broadcast %114 : vector<4x1xf32> to vector<4x256xf32>
    %117 = vector.broadcast %115 : vector<1x256xf32> to vector<4x256xf32>
    %118 = arith.mulf %116, %117 : vector<4x256xf32>
    %119 = arith.addf %113, %118 : vector<4x256xf32>
    %120 = vector.extract_strided_slice %84 {offsets = [0, 6], sizes = [4, 1], strides = [1, 1]} : vector<4x8xf32> to vector<4x1xf32>
    %121 = vector.extract_strided_slice %83 {offsets = [6, 0], sizes = [1, 256], strides = [1, 1]} : vector<8x256xf32> to vector<1x256xf32>
    %122 = vector.broadcast %120 : vector<4x1xf32> to vector<4x256xf32>
    %123 = vector.broadcast %121 : vector<1x256xf32> to vector<4x256xf32>
    %124 = arith.mulf %122, %123 : vector<4x256xf32>
    %125 = arith.addf %119, %124 : vector<4x256xf32>
    %126 = vector.extract_strided_slice %84 {offsets = [0, 7], sizes = [4, 1], strides = [1, 1]} : vector<4x8xf32> to vector<4x1xf32>
    %127 = vector.extract_strided_slice %83 {offsets = [7, 0], sizes = [1, 256], strides = [1, 1]} : vector<8x256xf32> to vector<1x256xf32>
    %128 = vector.broadcast %126 : vector<4x1xf32> to vector<4x256xf32>
    %129 = vector.broadcast %127 : vector<1x256xf32> to vector<4x256xf32>
    %130 = arith.mulf %128, %129 : vector<4x256xf32>
    %131 = arith.addf %125, %130 : vector<4x256xf32>
    %c0_13 = arith.constant 0 : index
    %c0_14 = arith.constant 0 : index
    %132 = vector.load %arg8[%c0_13, %c0_14] : memref<4x1xf32, #tpu.memory_space<vmem>>, vector<4x1xf32>
    %133 = vector.broadcast %132 : vector<4x1xf32> to vector<4x256xf32>
    %134 = arith.addf %131, %133 : vector<4x256xf32>
    %c0_15 = arith.constant 0 : index
    %c0_16 = arith.constant 0 : index
    %c0_17 = arith.constant 0 : index
    %135 = vector.load %arg9[%c0_15, %c0_16, %c0_17] : memref<1x4x256xf32, #tpu.memory_space<vmem>>, vector<1x4x256xf32>
    %136 = vector.shape_cast %135 : vector<1x4x256xf32> to vector<4x256xf32>
    %137 = vector.shape_cast %134 : vector<4x256xf32> to vector<1x4x256xf32>
    tpu.vector_store %arg9[%c0_15, %c0_16, %c0_17], %137 {strides = array<i32>} : memref<1x4x256xf32, #tpu.memory_space<vmem>>, vector<1x4x256xf32>,
    return
  }
  func.func @transform_0(%arg0: i32, %arg1: i32) -> (i32, i32, i32) {
    %c0_i32 = arith.constant 0 : i32
    %c0_i32_0 = arith.constant 0 : i32
    return %arg0, %c0_i32, %arg1 : i32, i32, i32
  }
  func.func @transform_1(%arg0: i32, %arg1: i32) -> (i32, i32) {
    %c0_i32 = arith.constant 0 : i32
    %c0_i32_0 = arith.constant 0 : i32
    %c0_i32_1 = arith.constant 0 : i32
    return %c0_i32, %c0_i32_0 : i32, i32
  }
  func.func @transform_2(%arg0: i32, %arg1: i32) -> (i32, i32) {
    %c0_i32 = arith.constant 0 : i32
    %c0_i32_0 = arith.constant 0 : i32
    %c0_i32_1 = arith.constant 0 : i32
    return %c0_i32, %c0_i32_0 : i32, i32
  }
  func.func @transform_3(%arg0: i32, %arg1: i32) -> (i32, i32) {
    %c0_i32 = arith.constant 0 : i32
    %c0_i32_0 = arith.constant 0 : i32
    %c0_i32_1 = arith.constant 0 : i32
    return %c0_i32, %c0_i32_0 : i32, i32
  }
  func.func @transform_4(%arg0: i32, %arg1: i32) -> (i32, i32) {
    %c0_i32 = arith.constant 0 : i32
    %c0_i32_0 = arith.constant 0 : i32
    %c0_i32_1 = arith.constant 0 : i32
    return %c0_i32, %c0_i32_0 : i32, i32
  }
  func.func @transform_5(%arg0: i32, %arg1: i32) -> (i32, i32) {
    %c0_i32 = arith.constant 0 : i32
    %c0_i32_0 = arith.constant 0 : i32
    %c0_i32_1 = arith.constant 0 : i32
    return %c0_i32, %c0_i32_0 : i32, i32
  }
  func.func @transform_6(%arg0: i32, %arg1: i32) -> (i32, i32) {
    %c0_i32 = arith.constant 0 : i32
    %c0_i32_0 = arith.constant 0 : i32
    %c0_i32_1 = arith.constant 0 : i32
    return %c0_i32, %c0_i32_0 : i32, i32
  }
  func.func @transform_7(%arg0: i32, %arg1: i32) -> (i32, i32, i32) {
    %c0_i32 = arith.constant 0 : i32
    %c0_i32_0 = arith.constant 0 : i32
    return %arg0, %c0_i32, %arg1 : i32, i32, i32
  }
}

module attributes {stable_mosaic.version = 11 : i64} {
  func.func @kernel(%arg0: i32, %arg1: i32, %arg2: memref<1x4x256xf32, #tpu.memory_space<vmem>>, %arg3: memref<8x4xf32, #tpu.memory_space<vmem>>, %arg4: memref<8x1xf32, #tpu.memory_space<vmem>>, %arg5: memref<8x8xf32, #tpu.memory_space<vmem>>, %arg6: memref<8x1xf32, #tpu.memory_space<vmem>>, %arg7: memref<4x8xf32, #tpu.memory_space<vmem>>, %arg8: memref<4x1xf32, #tpu.memory_space<vmem>>, %arg9: memref<1x4x256xf32, #tpu.memory_space<vmem>>) attributes {dimension_semantics = [#tpu.dimension_semantics<parallel>, #tpu.dimension_semantics<parallel>], iteration_bounds = array<i64: 2, 1>, scalar_prefetch = 0 : i64, scratch_operands = 0 : i64, tpu.core_type = #tpu.core_type<tc>, window_params = [{transform_indices = @transform_0, window_bounds = array<i64: 1, 4, 256>}, {pipeline_mode = #tpu.pipeline_mode<synchronous>, transform_indices = @transform_1, window_bounds = array<i64: 8, 4>}, {pipeline_mode = #tpu.pipeline_mode<synchronous>, transform_indices = @transform_2, window_bounds = array<i64: 8, 1>}, {pipeline_mode = #tpu.pipeline_mode<synchronous>, transform_indices = @transform_3, window_bounds = array<i64: 8, 8>}, {pipeline_mode = #tpu.pipeline_mode<synchronous>, transform_indices = @transform_4, window_bounds = array<i64: 8, 1>}, {pipeline_mode = #tpu.pipeline_mode<synchronous>, transform_indices = @transform_5, window_bounds = array<i64: 4, 8>}, {pipeline_mode = #tpu.pipeline_mode<synchronous>, transform_indices = @transform_6, window_bounds = array<i64: 4, 1>}, {transform_indices = @transform_7, window_bounds = array<i64: 1, 4, 256>}]} {
    %c0 = arith.constant 0 : index
    %c0_0 = arith.constant 0 : index
    %c0_1 = arith.constant 0 : index
    %0 = vector.load %arg2[%c0, %c0_0, %c0_1] : memref<1x4x256xf32, #tpu.memory_space<vmem>>, vector<1x4x256xf32>
    %1 = vector.shape_cast %0 : vector<1x4x256xf32> to vector<4x256xf32>
    %c0_2 = arith.constant 0 : index
    %c0_3 = arith.constant 0 : index
    %2 = vector.load %arg3[%c0_2, %c0_3] : memref<8x4xf32, #tpu.memory_space<vmem>>, vector<8x4xf32>
    %cst = arith.constant dense<0.000000e+00> : vector<8x256xf32>
    %3 = tpu.matmul %2, %1, %cst {dimension_numbers = #tpu.dot_dimension_numbers<[1], [0], [0], [1], [0, 0, 1, 1], [], []>} : vector<8x4xf32>, vector<4x256xf32>, vector<8x256xf32> -> vector<8x256xf32>
    %c0_4 = arith.constant 0 : index
    %c0_5 = arith.constant 0 : index
    %4 = vector.load %arg4[%c0_4, %c0_5] : memref<8x1xf32, #tpu.memory_space<vmem>>, vector<8x1xf32>
    %5 = vector.broadcast %4 : vector<8x1xf32> to vector<8x256xf32>
    %6 = arith.addf %3, %5 : vector<8x256xf32>
    %cst_6 = arith.constant 0.000000e+00 : f32
    %7 = vector.broadcast %cst_6 : f32 to vector<8x256xf32>
    %8 = arith.maximumf %6, %7 : vector<8x256xf32>
    %c0_7 = arith.constant 0 : index
    %c0_8 = arith.constant 0 : index
    %9 = vector.load %arg5[%c0_7, %c0_8] : memref<8x8xf32, #tpu.memory_space<vmem>>, vector<8x8xf32>
    %cst_9 = arith.constant dense<0.000000e+00> : vector<8x256xf32>
    %10 = tpu.matmul %9, %8, %cst_9 {dimension_numbers = #tpu.dot_dimension_numbers<[1], [0], [0], [1], [0, 0, 1, 1], [], []>} : vector<8x8xf32>, vector<8x256xf32>, vector<8x256xf32> -> vector<8x256xf32>
    %c0_10 = arith.constant 0 : index
    %c0_11 = arith.constant 0 : index
    %11 = vector.load %arg6[%c0_10, %c0_11] : memref<8x1xf32, #tpu.memory_space<vmem>>, vector<8x1xf32>
    %12 = vector.broadcast %11 : vector<8x1xf32> to vector<8x256xf32>
    %13 = arith.addf %10, %12 : vector<8x256xf32>
    %cst_12 = arith.constant 0.000000e+00 : f32
    %14 = vector.broadcast %cst_12 : f32 to vector<8x256xf32>
    %15 = arith.maximumf %13, %14 : vector<8x256xf32>
    %c0_13 = arith.constant 0 : index
    %c0_14 = arith.constant 0 : index
    %16 = vector.load %arg7[%c0_13, %c0_14] : memref<4x8xf32, #tpu.memory_space<vmem>>, vector<4x8xf32>
    %cst_15 = arith.constant dense<0.000000e+00> : vector<4x256xf32>
    %17 = tpu.matmul %16, %15, %cst_15 {dimension_numbers = #tpu.dot_dimension_numbers<[1], [0], [0], [1], [0, 0, 1, 1], [], []>} : vector<4x8xf32>, vector<8x256xf32>, vector<4x256xf32> -> vector<4x256xf32>
    %c0_16 = arith.constant 0 : index
    %c0_17 = arith.constant 0 : index
    %18 = vector.load %arg8[%c0_16, %c0_17] : memref<4x1xf32, #tpu.memory_space<vmem>>, vector<4x1xf32>
    %19 = vector.broadcast %18 : vector<4x1xf32> to vector<4x256xf32>
    %20 = arith.addf %17, %19 : vector<4x256xf32>
    %c0_18 = arith.constant 0 : index
    %c0_19 = arith.constant 0 : index
    %c0_20 = arith.constant 0 : index
    %21 = vector.load %arg9[%c0_18, %c0_19, %c0_20] : memref<1x4x256xf32, #tpu.memory_space<vmem>>, vector<1x4x256xf32>
    %22 = vector.shape_cast %21 : vector<1x4x256xf32> to vector<4x256xf32>
    %23 = vector.shape_cast %20 : vector<4x256xf32> to vector<1x4x256xf32>
    tpu.vector_store %arg9[%c0_18, %c0_19, %c0_20], %23 {strides = array<i32>} : memref<1x4x256xf32, #tpu.memory_space<vmem>>, vector<1x4x256xf32>,
    return
  }
  func.func @transform_0(%arg0: i32, %arg1: i32) -> (i32, i32, i32) {
    %c0_i32 = arith.constant 0 : i32
    %c0_i32_0 = arith.constant 0 : i32
    return %arg0, %c0_i32, %arg1 : i32, i32, i32
  }
  func.func @transform_1(%arg0: i32, %arg1: i32) -> (i32, i32) {
    %c0_i32 = arith.constant 0 : i32
    %c0_i32_0 = arith.constant 0 : i32
    %c0_i32_1 = arith.constant 0 : i32
    return %c0_i32, %c0_i32_0 : i32, i32
  }
  func.func @transform_2(%arg0: i32, %arg1: i32) -> (i32, i32) {
    %c0_i32 = arith.constant 0 : i32
    %c0_i32_0 = arith.constant 0 : i32
    %c0_i32_1 = arith.constant 0 : i32
    return %c0_i32, %c0_i32_0 : i32, i32
  }
  func.func @transform_3(%arg0: i32, %arg1: i32) -> (i32, i32) {
    %c0_i32 = arith.constant 0 : i32
    %c0_i32_0 = arith.constant 0 : i32
    %c0_i32_1 = arith.constant 0 : i32
    return %c0_i32, %c0_i32_0 : i32, i32
  }
  func.func @transform_4(%arg0: i32, %arg1: i32) -> (i32, i32) {
    %c0_i32 = arith.constant 0 : i32
    %c0_i32_0 = arith.constant 0 : i32
    %c0_i32_1 = arith.constant 0 : i32
    return %c0_i32, %c0_i32_0 : i32, i32
  }
  func.func @transform_5(%arg0: i32, %arg1: i32) -> (i32, i32) {
    %c0_i32 = arith.constant 0 : i32
    %c0_i32_0 = arith.constant 0 : i32
    %c0_i32_1 = arith.constant 0 : i32
    return %c0_i32, %c0_i32_0 : i32, i32
  }
  func.func @transform_6(%arg0: i32, %arg1: i32) -> (i32, i32) {
    %c0_i32 = arith.constant 0 : i32
    %c0_i32_0 = arith.constant 0 : i32
    %c0_i32_1 = arith.constant 0 : i32
    return %c0_i32, %c0_i32_0 : i32, i32
  }
  func.func @transform_7(%arg0: i32, %arg1: i32) -> (i32, i32, i32) {
    %c0_i32 = arith.constant 0 : i32
    %c0_i32_0 = arith.constant 0 : i32
    return %arg0, %c0_i32, %arg1 : i32, i32, i32
  }
}

</mosaic_0001>

<llo_original>
// kernel: mlp_flat.1
$region0: #{mlp_flat.1}
  #allocation0 [shape = 'u32[]', space=smem, size = 0x4, offset = 0x4, fixed_abs, tag = 'smem constant byte address 0x4 - core index']
  #allocation1 [shape = 'u32[144,128]{1,0:T(1,128)}', space=vmem, size = 0x12000, scoped, tag = 'internal scratch']
  %s0 = inlined_call_operand.vmem [shape: f32[2,4,256], index: 0, kind: input, shape index: {}]
  %s1 = inlined_call_operand.vmem [shape: f32[8,4], index: 1, kind: input, shape index: {}]
  %s2 = inlined_call_operand.vmem [shape: f32[8,1], index: 2, kind: input, shape index: {}]
  %s3 = inlined_call_operand.vmem [shape: f32[8,8], index: 3, kind: input, shape index: {}]
  %s4 = inlined_call_operand.vmem [shape: f32[8,1], index: 4, kind: input, shape index: {}]
  %s5 = inlined_call_operand.vmem [shape: f32[4,8], index: 5, kind: input, shape index: {}]
  %s6 = inlined_call_operand.vmem [shape: f32[4,1], index: 6, kind: input, shape index: {}]
  %s7 = inlined_call_operand.hbm [shape: f32[2,4,256], index: 7, kind: output, shape index: {}]
  %s8 = sld [smem:[#allocation0]]
  $region61: #{mlp_flat.1} parent=0
    _
  %s10 = ssub.s32 1, %s8
  %s11 = scalar_select 0, %s10, %s8
  $region1: #{mlp_flat.1} parent=0
    #allocation2 [shape = 'u8[8192]{0}', space=vmem, size = 0x2000, scoped, tag = 'output window, operand 0']
    #allocation3 [shape = 's32[2]{0}', space=sflag, size = 0x8, scoped, tag = 'scoped memory for mlp_flat.1']
    %12 = vsyncpa [#allocation3], 0
    %s13 = scalar_lea.sflag [#allocation3], 1
    %14 = vsyncpa %s13, 0
    loop: start=0, step=1, limit=4
    $region2: #{mlp_flat.1} parent=1 // loop_pre_header
      _
    $region3: #{mlp_flat.1} parent=1 // loop_header
      %s16 = sphi 0, %s20
      %p17 = scmp.ge.s32.totalorder %s16, 4
      %s23 = sphi 0, %s35
      %s24 = sphi 0, %s31
      %s25 = sphi 0, %s23
      %s26 = sphi 0, %s24
      %s27 = sphi 0, %s25
      %s28 = sphi 0, %s26
      %s40 = sphi 0, %s42
      %s43 = sphi 0, %s40
      %s44 = sphi 0, %s43
      %s60 = sphi 0, %s44
      %s64 = sphi 0, %s64
      %s66 = sphi 0, %s64
      %s67 = sphi 0, %s66
      %s81 = sphi 0, %s67
      %s85 = sphi 0, %s85
      %s87 = sphi 0, %s85
      %s88 = sphi 0, %s87
      %s102 = sphi 0, %s88
      %s106 = sphi 0, %s106
      %s108 = sphi 0, %s106
      %s109 = sphi 0, %s108
      %s123 = sphi 0, %s109
      %s127 = sphi 0, %s127
      %s129 = sphi 0, %s127
      %s130 = sphi 0, %s129
      %s144 = sphi 0, %s130
      %s148 = sphi 0, %s148
      %s150 = sphi 0, %s148
      %s151 = sphi 0, %s150
      %s165 = sphi 0, %s151
      %s169 = sphi 0, %s169
      %s171 = sphi 0, %s169
      %s172 = sphi 0, %s171
      %s186 = sphi 0, %s172
      %s194 = sphi 0, %s196
      %s197 = sphi 0, %s194
      %s198 = sphi 0, %s197
      %s214 = sphi 0, %s198
    $region4: #{mlp_flat.1} parent=1 // loop_header_branch
      %19 = sbr.rel (%p17) target = $region8
    $region5: #{mlp_flat.1} parent=1 // loop_body
      %s21 = ssub.s32 %s16, 1
      %s22 = ssub.s32 %s16, 2
      %s29 = sadd.s32 1, %s24
      %p30 = scmp.ge.s32.totalorder %s29, 1
      %s31 = scalar_select %p30, 0, %s29
      %s32 = sadd.s32 1, %s23
      %s33 = scalar_select %p30, %s32, %s23
      %p34 = scmp.ge.s32.totalorder %s33, 2
      %s35 = scalar_select %p34, 0, %s33
      %s36 = ssub.s32 %s23, %s35
      %s37 = ssub.s32 %s24, %s31
      %s38 = sor.u32 %s36, %s37
      %p39 = scmp.eq.s32.totalorder %s38, 0
      %s41 = sadd.s32 %s40, 1
      %s42 = scalar_select %p39, %s40, %s41
      %p45 = pneg %p39
      %p46 = scmp.eq.s32.totalorder %s16, 1
      %p47 = por %p45, %p46
      %p48 = scmp.ne.s32.totalorder %s40, %s43
      %p49 = scmp.eq.s32.totalorder %s16, 0
      %p50 = por %p48, %p49
      %p51 = scmp.ne.s32.totalorder %s40, %s43
      %p52 = scmp.eq.s32.totalorder %s21, 1
      %p53 = por %p51, %p52
      %p54 = scmp.ne.s32.totalorder %s43, %s44
      %p55 = scmp.eq.s32.totalorder %s21, 0
      %p56 = por %p54, %p55
      %p57 = scmp.ne.s32.totalorder %s43, %s44
      %p58 = scmp.eq.s32.totalorder %s22, 1
      %p59 = por %p57, %p58
      %p61 = scmp.ne.s32.totalorder %s44, %s60
      %p62 = scmp.eq.s32.totalorder %s22, 0
      %p63 = por %p61, %p62
      %s65 = sadd.s32 %s64, 1
      %p68 = scmp.eq.s32.totalorder %s16, 1
      %p69 = scmp.ne.s32.totalorder %s64, %s66
      %p70 = scmp.eq.s32.totalorder %s16, 0
      %p71 = por %p69, %p70
      %p72 = scmp.ne.s32.totalorder %s64, %s66
      %p73 = scmp.eq.s32.totalorder %s21, 1
      %p74 = por %p72, %p73
      %p75 = scmp.ne.s32.totalorder %s66, %s67
      %p76 = scmp.eq.s32.totalorder %s21, 0
      %p77 = por %p75, %p76
      %p78 = scmp.ne.s32.totalorder %s66, %s67
      %p79 = scmp.eq.s32.totalorder %s22, 1
      %p80 = por %p78, %p79
      %p82 = scmp.ne.s32.totalorder %s67, %s81
      %p83 = scmp.eq.s32.totalorder %s22, 0
      %p84 = por %p82, %p83
      %s86 = sadd.s32 %s85, 1
      %p89 = scmp.eq.s32.totalorder %s16, 1
      %p90 = scmp.ne.s32.totalorder %s85, %s87
      %p91 = scmp.eq.s32.totalorder %s16, 0
      %p92 = por %p90, %p91
      %p93 = scmp.ne.s32.totalorder %s85, %s87
      %p94 = scmp.eq.s32.totalorder %s21, 1
      %p95 = por %p93, %p94
      %p96 = scmp.ne.s32.totalorder %s87, %s88
      %p97 = scmp.eq.s32.totalorder %s21, 0
      %p98 = por %p96, %p97
      %p99 = scmp.ne.s32.totalorder %s87, %s88
      %p100 = scmp.eq.s32.totalorder %s22, 1
      %p101 = por %p99, %p100
      %p103 = scmp.ne.s32.totalorder %s88, %s102
      %p104 = scmp.eq.s32.totalorder %s22, 0
      %p105 = por %p103, %p104
      %s107 = sadd.s32 %s106, 1
      %p110 = scmp.eq.s32.totalorder %s16, 1
      %p111 = scmp.ne.s32.totalorder %s106, %s108
      %p112 = scmp.eq.s32.totalorder %s16, 0
      %p113 = por %p111, %p112
      %p114 = scmp.ne.s32.totalorder %s106, %s108
      %p115 = scmp.eq.s32.totalorder %s21, 1
      %p116 = por %p114, %p115
      %p117 = scmp.ne.s32.totalorder %s108, %s109
      %p118 = scmp.eq.s32.totalorder %s21, 0
      %p119 = por %p117, %p118
      %p120 = scmp.ne.s32.totalorder %s108, %s109
      %p121 = scmp.eq.s32.totalorder %s22, 1
      %p122 = por %p120, %p121
      %p124 = scmp.ne.s32.totalorder %s109, %s123
      %p125 = scmp.eq.s32.totalorder %s22, 0
      %p126 = por %p124, %p125
      %s128 = sadd.s32 %s127, 1
      %p131 = scmp.eq.s32.totalorder %s16, 1
      %p132 = scmp.ne.s32.totalorder %s127, %s129
      %p133 = scmp.eq.s32.totalorder %s16, 0
      %p134 = por %p132, %p133
      %p135 = scmp.ne.s32.totalorder %s127, %s129
      %p136 = scmp.eq.s32.totalorder %s21, 1
      %p137 = por %p135, %p136
      %p138 = scmp.ne.s32.totalorder %s129, %s130
      %p139 = scmp.eq.s32.totalorder %s21, 0
      %p140 = por %p138, %p139
      %p141 = scmp.ne.s32.totalorder %s129, %s130
      %p142 = scmp.eq.s32.totalorder %s22, 1
      %p143 = por %p141, %p142
      %p145 = scmp.ne.s32.totalorder %s130, %s144
      %p146 = scmp.eq.s32.totalorder %s22, 0
      %p147 = por %p145, %p146
      %s149 = sadd.s32 %s148, 1
      %p152 = scmp.eq.s32.totalorder %s16, 1
      %p153 = scmp.ne.s32.totalorder %s148, %s150
      %p154 = scmp.eq.s32.totalorder %s16, 0
      %p155 = por %p153, %p154
      %p156 = scmp.ne.s32.totalorder %s148, %s150
      %p157 = scmp.eq.s32.totalorder %s21, 1
      %p158 = por %p156, %p157
      %p159 = scmp.ne.s32.totalorder %s150, %s151
      %p160 = scmp.eq.s32.totalorder %s21, 0
      %p161 = por %p159, %p160
      %p162 = scmp.ne.s32.totalorder %s150, %s151
      %p163 = scmp.eq.s32.totalorder %s22, 1
      %p164 = por %p162, %p163
      %p166 = scmp.ne.s32.totalorder %s151, %s165
      %p167 = scmp.eq.s32.totalorder %s22, 0
      %p168 = por %p166, %p167
      %s170 = sadd.s32 %s169, 1
      %p173 = scmp.eq.s32.totalorder %s16, 1
      %p174 = scmp.ne.s32.totalorder %s169, %s171
      %p175 = scmp.eq.s32.totalorder %s16, 0
      %p176 = por %p174, %p175
      %p177 = scmp.ne.s32.totalorder %s169, %s171
      %p178 = scmp.eq.s32.totalorder %s21, 1
      %p179 = por %p177, %p178
      %p180 = scmp.ne.s32.totalorder %s171, %s172
      %p181 = scmp.eq.s32.totalorder %s21, 0
      %p182 = por %p180, %p181
      %p183 = scmp.ne.s32.totalorder %s171, %s172
      %p184 = scmp.eq.s32.totalorder %s22, 1
      %p185 = por %p183, %p184
      %p187 = scmp.ne.s32.totalorder %s172, %s186
      %p188 = scmp.eq.s32.totalorder %s22, 0
      %p189 = por %p187, %p188
      %s190 = ssub.s32 %s23, %s35
      %s191 = ssub.s32 %s24, %s31
      %s192 = sor.u32 %s190, %s191
      %p193 = scmp.eq.s32.totalorder %s192, 0
      %s195 = sadd.s32 %s194, 1
      %s196 = scalar_select %p193, %s194, %s195
      %p199 = pneg %p193
      %p200 = scmp.eq.s32.totalorder %s16, 1
      %p201 = por %p199, %p200
      %p202 = scmp.ne.s32.totalorder %s194, %s197
      %p203 = scmp.eq.s32.totalorder %s16, 0
      %p204 = por %p202, %p203
      %p205 = scmp.ne.s32.totalorder %s194, %s197
      %p206 = scmp.eq.s32.totalorder %s21, 1
      %p207 = por %p205, %p206
      %p208 = scmp.ne.s32.totalorder %s197, %s198
      %p209 = scmp.eq.s32.totalorder %s21, 0
      %p210 = por %p208, %p209
      %p211 = scmp.ne.s32.totalorder %s197, %s198
      %p212 = scmp.eq.s32.totalorder %s22, 1
      %p213 = por %p211, %p212
      %p215 = scmp.ne.s32.totalorder %s198, %s214
      %p216 = scmp.eq.s32.totalorder %s22, 0
      %p217 = por %p215, %p216
      %p218 = scmp.le.s32.totalorder 1, %s16
      %p219 = scmp.lt.s32.totalorder %s16, 3
      %p220 = pnand %p218, %p219
      %p221 = pneg %p220
      // Predicated region
      $region9: #{mlp_flat.1} parent=5 // pred_check
        _
      $region10: #{mlp_flat.1} parent=5 // pred_check_branch
        %223 = sbr.rel (%p220) target = $region12
      $region11: #{mlp_flat.1} parent=5 // pred_region
        %s224 = ssub.s32 %s16, 1
        // Predicated region
        $region13: #{mlp_flat.1} parent=11 // pred_check
          %p225 = pneg %p77
        $region14: #{mlp_flat.1} parent=11 // pred_check_branch
          %227 = sbr.rel (%p225) target = $region16
        $region15: #{mlp_flat.1} parent=11 // pred_region
          _
        $region16: #{mlp_flat.1} parent=11 // pred_fallthru
          _
        // Predicated region
        $region17: #{mlp_flat.1} parent=11 // pred_check
          %p228 = pneg %p98
        $region18: #{mlp_flat.1} parent=11 // pred_check_branch
          %230 = sbr.rel (%p228) target = $region20
        $region19: #{mlp_flat.1} parent=11 // pred_region
          _
        $region20: #{mlp_flat.1} parent=11 // pred_fallthru
          _
        // Predicated region
        $region21: #{mlp_flat.1} parent=11 // pred_check
          %p231 = pneg %p119
        $region22: #{mlp_flat.1} parent=11 // pred_check_branch
          %233 = sbr.rel (%p231) target = $region24
        $region23: #{mlp_flat.1} parent=11 // pred_region
          _
        $region24: #{mlp_flat.1} parent=11 // pred_fallthru
          _
        // Predicated region
        $region25: #{mlp_flat.1} parent=11 // pred_check
          %p234 = pneg %p140
        $region26: #{mlp_flat.1} parent=11 // pred_check_branch
          %236 = sbr.rel (%p234) target = $region28
        $region27: #{mlp_flat.1} parent=11 // pred_region
          _
        $region28: #{mlp_flat.1} parent=11 // pred_fallthru
          _
        // Predicated region
        $region29: #{mlp_flat.1} parent=11 // pred_check
          %p237 = pneg %p161
        $region30: #{mlp_flat.1} parent=11 // pred_check_branch
          %239 = sbr.rel (%p237) target = $region32
        $region31: #{mlp_flat.1} parent=11 // pred_region
          _
        $region32: #{mlp_flat.1} parent=11 // pred_fallthru
          _
        // Predicated region
        $region33: #{mlp_flat.1} parent=11 // pred_check
          %p240 = pneg %p182
        $region34: #{mlp_flat.1} parent=11 // pred_check_branch
          %242 = sbr.rel (%p240) target = $region36
        $region35: #{mlp_flat.1} parent=11 // pred_region
          _
        $region36: #{mlp_flat.1} parent=11 // pred_fallthru
          _
      $region12: #{mlp_flat.1} parent=5 // pred_fallthru
        _
      %p243 = scmp.lt.s32.totalorder %s16, 2
      // Predicated region
      $region37: #{mlp_flat.1} parent=5 // pred_check
        %p244 = pneg %p243
      $region38: #{mlp_flat.1} parent=5 // pred_check_branch
        %246 = sbr.rel (%p244) target = $region40
      $region39: #{mlp_flat.1} parent=5 // pred_region
        // Predicated region
        $region41: #{mlp_flat.1} parent=39 // pred_check
          %p247 = pneg %p50
        $region42: #{mlp_flat.1} parent=39 // pred_check_branch
          %249 = sbr.rel (%p247) target = $region44
        $region43: #{mlp_flat.1} parent=39 // pred_region
          %s250 = smul.u32 2, %s24
          %p251 = scmp.lt.s32.totalorder %s23, 1
          %s252 = scalar_select %p251, %s23, 1
          %p253 = scmp.lt.s32.totalorder %s250, 1
          %s254 = scalar_select %p253, %s250, 1
          %s255 = smul.addr %s252, 2
          %s256 = sadd.s32 %s254, %s255
          %s257 = smul.addr %s256, 4
          %s258 = scalar_lea.vmem %s0, %s257
          %s259 = smul.u32 2, %s24
        $region44: #{mlp_flat.1} parent=39 // pred_fallthru
          _
      $region40: #{mlp_flat.1} parent=5 // pred_fallthru
        _
      %p260 = scmp.le.s32.totalorder 1, %s16
      %p261 = scmp.lt.s32.totalorder %s16, 3
      %p262 = pnand %p260, %p261
      %p263 = pneg %p262
      // Predicated region
      $region45: #{mlp_flat.1} parent=5 // pred_check
        _
      $region46: #{mlp_flat.1} parent=5 // pred_check_branch
        %265 = sbr.rel (%p262) target = $region48
      $region47: #{mlp_flat.1} parent=5 // pred_region
        %s266 = ssub.s32 %s16, 1
        %s267 = smul.u32 2, %s26
        %p268 = scmp.lt.s32.totalorder %s25, 1
        %s269 = scalar_select %p268, %s25, 1
        %p270 = scmp.lt.s32.totalorder %s267, 1
        %s271 = scalar_select %p270, %s267, 1
        %s272 = smul.addr %s269, 2
        %s273 = sadd.s32 %s271, %s272
        %s274 = smul.addr %s273, 4
        %s275 = scalar_lea.vmem %s0, %s274
        %p276 = pneg %p56
        %p277 = pneg %p53
        %p278 = pneg %p77
        %p279 = pneg %p74
        %p280 = pneg %p98
        %p281 = pneg %p95
        %p282 = pneg %p119
        %p283 = pneg %p116
        %p284 = pneg %p140
        %p285 = pneg %p137
        %p286 = pneg %p161
        %p287 = pneg %p158
        %p288 = pneg %p182
        %p289 = pneg %p179
        %p290 = pneg %p210
        %p291 = pneg %p207
        %s292 = sand.u32 %s197, 1
        %s293 = scalar_lea.sflag [#allocation3], %s292
        %s294 = sand.u32 %s197, 1
        %s295 = smul.addr %s294, 8
        %s296 = scalar_lea.vmem [#allocation2], %s295
        %s297 = smul.u32 2, %s26
        %p298 = scmp.lt.s32.totalorder %s25, 1
        %s299 = scalar_select %p298, %s25, 1
        %p300 = scmp.lt.s32.totalorder %s297, 1
        %s301 = scalar_select %p300, %s297, 1
        %s302 = smul.addr %s299, 2
        %s303 = sadd.s32 %s301, %s302
        %s304 = smul.addr %s303, 4
        %s305 = scalar_lea.vmem %s0, %s304
        %s306 = smul.u32 2, %s26
        %s307 = smul.u32 2, %s26
        %v308 = vld [vmem:[%s305] sm:$0xff]
        %v309 = vld [vmem:[%s1] sm:$0xff]
        %311 = vset.pattern.permute.xlu0 0
        %312 = vperm.xlu0 %311, %v309
        %v313 = vpop.permute.xlu0 %312
        %v316 = vlaneseq
        %v317 = vshrl.u32 %v316, 7
        %v318 = vsub.s32 0, %v317
        %v319 = vrot.slane %v308, %v318
        %v320 = vlaneseq
        %v321 = vshrl.u32 %v320, 7
        %v322 = vsub.s32 4, %v321
        %v323 = vrot.slane %v308, %v322
        %v326 = vlaneseq
        %v327 = vshrl.u32 %v326, 7
        %v328 = vsub.s32 0, %v327
        %v329 = vrot.slane %v319, %v328
        %v330 = vlaneseq
        %v331 = vshrl.u32 %v330, 7
        %v332 = vsub.s32 0, %v331
        %v333 = vrot.slane %v323, %v332
        %v334 = vmul.f32 %v313, %v329
        %v335 = vmul.f32 %v313, %v333
        %336 = vset.pattern.permute.xlu0 1
        %337 = vperm.xlu0 %336, %v309
        %v338 = vpop.permute.xlu0 %337
        %v340 = vlaneseq
        %v341 = vshrl.u32 %v340, 7
        %v342 = vsub.s32 1, %v341
        %v343 = vrot.slane %v308, %v342
        %v344 = vlaneseq
        %v345 = vshrl.u32 %v344, 7
        %v346 = vsub.s32 5, %v345
        %v347 = vrot.slane %v308, %v346
        %v350 = vlaneseq
        %v351 = vshrl.u32 %v350, 7
        %v352 = vsub.s32 1, %v351
        %v353 = vrot.slane %v343, %v352
        %v354 = vlaneseq
        %v355 = vshrl.u32 %v354, 7
        %v356 = vsub.s32 1, %v355
        %v357 = vrot.slane %v347, %v356
        %v358 = vmul.f32 %v338, %v353
        %v359 = vmul.f32 %v338, %v357
        %v360 = vadd.f32 %v334, %v358
        %v361 = vadd.f32 %v335, %v359
        %362 = vset.pattern.permute.xlu0 2
        %363 = vperm.xlu0 %362, %v309
        %v364 = vpop.permute.xlu0 %363
        %v366 = vlaneseq
        %v367 = vshrl.u32 %v366, 7
        %v368 = vsub.s32 2, %v367
        %v369 = vrot.slane %v308, %v368
        %v370 = vlaneseq
        %v371 = vshrl.u32 %v370, 7
        %v372 = vsub.s32 6, %v371
        %v373 = vrot.slane %v308, %v372
        %v376 = vlaneseq
        %v377 = vshrl.u32 %v376, 7
        %v378 = vsub.s32 2, %v377
        %v379 = vrot.slane %v369, %v378
        %v380 = vlaneseq
        %v381 = vshrl.u32 %v380, 7
        %v382 = vsub.s32 2, %v381
        %v383 = vrot.slane %v373, %v382
        %v384 = vmul.f32 %v364, %v379
        %v385 = vmul.f32 %v364, %v383
        %v386 = vadd.f32 %v360, %v384
        %v387 = vadd.f32 %v361, %v385
        %388 = vset.pattern.permute.xlu0 3
        %389 = vperm.xlu0 %388, %v309
        %v390 = vpop.permute.xlu0 %389
        %v392 = vlaneseq
        %v393 = vshrl.u32 %v392, 7
        %v394 = vsub.s32 3, %v393
        %v395 = vrot.slane %v308, %v394
        %v396 = vlaneseq
        %v397 = vshrl.u32 %v396, 7
        %v398 = vsub.s32 7, %v397
        %v399 = vrot.slane %v308, %v398
        %v402 = vlaneseq
        %v403 = vshrl.u32 %v402, 7
        %v404 = vsub.s32 3, %v403
        %v405 = vrot.slane %v395, %v404
        %v406 = vlaneseq
        %v407 = vshrl.u32 %v406, 7
        %v408 = vsub.s32 3, %v407
        %v409 = vrot.slane %v399, %v408
        %v410 = vmul.f32 %v390, %v405
        %v411 = vmul.f32 %v390, %v409
        %v412 = vadd.f32 %v386, %v410
        %v413 = vadd.f32 %v387, %v411
        %v414 = vld [vmem:[%s2] sm:$0xff]
        %416 = vset.pattern.permute.xlu0 0
        %417 = vperm.xlu0 %416, %v414
        %v418 = vpop.permute.xlu0 %417
        %v420 = vadd.f32 %v412, %v418
        %v421 = vadd.f32 %v413, %v418
        %v422 = vmax.f32 %v420, 0.0
        %v423 = vmax.f32 %v421, 0.0
        %v424 = vld [vmem:[%s3] sm:$0xff]
        %426 = vset.pattern.permute.xlu0 0
        %427 = vperm.xlu0 %426, %v424
        %v428 = vpop.permute.xlu0 %427
        %v430 = vlaneseq
        %v431 = vshrl.u32 %v430, 7
        %v432 = vsub.s32 0, %v431
        %v433 = vrot.slane %v422, %v432
        %v434 = vlaneseq
        %v435 = vshrl.u32 %v434, 7
        %v436 = vsub.s32 0, %v435
        %v437 = vrot.slane %v423, %v436
        %v438 = vmul.f32 %v428, %v433
        %v439 = vmul.f32 %v428, %v437
        %440 = vset.pattern.permute.xlu0 1
        %441 = vperm.xlu0 %440, %v424
        %v442 = vpop.permute.xlu0 %441
        %v444 = vlaneseq
        %v445 = vshrl.u32 %v444, 7
        %v446 = vsub.s32 1, %v445
        %v447 = vrot.slane %v422, %v446
        %v448 = vlaneseq
        %v449 = vshrl.u32 %v448, 7
        %v450 = vsub.s32 1, %v449
        %v451 = vrot.slane %v423, %v450
        %v452 = vmul.f32 %v442, %v447
        %v453 = vmul.f32 %v442, %v451
        %v454 = vadd.f32 %v438, %v452
        %v455 = vadd.f32 %v439, %v453
        %456 = vset.pattern.permute.xlu0 2
        %457 = vperm.xlu0 %456, %v424
        %v458 = vpop.permute.xlu0 %457
        %v460 = vlaneseq
        %v461 = vshrl.u32 %v460, 7
        %v462 = vsub.s32 2, %v461
        %v463 = vrot.slane %v422, %v462
        %v464 = vlaneseq
        %v465 = vshrl.u32 %v464, 7
        %v466 = vsub.s32 2, %v465
        %v467 = vrot.slane %v423, %v466
        %v468 = vmul.f32 %v458, %v463
        %v469 = vmul.f32 %v458, %v467
        %v470 = vadd.f32 %v454, %v468
        %v471 = vadd.f32 %v455, %v469
        %472 = vset.pattern.permute.xlu0 3
        %473 = vperm.xlu0 %472, %v424
        %v474 = vpop.permute.xlu0 %473
        %v476 = vlaneseq
        %v477 = vshrl.u32 %v476, 7
        %v478 = vsub.s32 3, %v477
        %v479 = vrot.slane %v422, %v478
        %v480 = vlaneseq
        %v481 = vshrl.u32 %v480, 7
        %v482 = vsub.s32 3, %v481
        %v483 = vrot.slane %v423, %v482
        %v484 = vmul.f32 %v474, %v479
        %v485 = vmul.f32 %v474, %v483
        %v486 = vadd.f32 %v470, %v484
        %v487 = vadd.f32 %v471, %v485
        %488 = vset.pattern.permute.xlu0 4
        %489 = vperm.xlu0 %488, %v424
        %v490 = vpop.permute.xlu0 %489
        %v492 = vlaneseq
        %v493 = vshrl.u32 %v492, 7
        %v494 = vsub.s32 4, %v493
        %v495 = vrot.slane %v422, %v494
        %v496 = vlaneseq
        %v497 = vshrl.u32 %v496, 7
        %v498 = vsub.s32 4, %v497
        %v499 = vrot.slane %v423, %v498
        %v500 = vmul.f32 %v490, %v495
        %v501 = vmul.f32 %v490, %v499
        %v502 = vadd.f32 %v486, %v500
        %v503 = vadd.f32 %v487, %v501
        %504 = vset.pattern.permute.xlu0 5
        %505 = vperm.xlu0 %504, %v424
        %v506 = vpop.permute.xlu0 %505
        %v508 = vlaneseq
        %v509 = vshrl.u32 %v508, 7
        %v510 = vsub.s32 5, %v509
        %v511 = vrot.slane %v422, %v510
        %v512 = vlaneseq
        %v513 = vshrl.u32 %v512, 7
        %v514 = vsub.s32 5, %v513
        %v515 = vrot.slane %v423, %v514
        %v516 = vmul.f32 %v506, %v511
        %v517 = vmul.f32 %v506, %v515
        %v518 = vadd.f32 %v502, %v516
        %v519 = vadd.f32 %v503, %v517
        %520 = vset.pattern.permute.xlu0 6
        %521 = vperm.xlu0 %520, %v424
        %v522 = vpop.permute.xlu0 %521
        %v524 = vlaneseq
        %v525 = vshrl.u32 %v524, 7
        %v526 = vsub.s32 6, %v525
        %v527 = vrot.slane %v422, %v526
        %v528 = vlaneseq
        %v529 = vshrl.u32 %v528, 7
        %v530 = vsub.s32 6, %v529
        %v531 = vrot.slane %v423, %v530
        %v532 = vmul.f32 %v522, %v527
        %v533 = vmul.f32 %v522, %v531
        %v534 = vadd.f32 %v518, %v532
        %v535 = vadd.f32 %v519, %v533
        %536 = vset.pattern.permute.xlu0 7
        %537 = vperm.xlu0 %536, %v424
        %v538 = vpop.permute.xlu0 %537
        %v540 = vlaneseq
        %v541 = vshrl.u32 %v540, 7
        %v542 = vsub.s32 7, %v541
        %v543 = vrot.slane %v422, %v542
        %v544 = vlaneseq
        %v545 = vshrl.u32 %v544, 7
        %v546 = vsub.s32 7, %v545
        %v547 = vrot.slane %v423, %v546
        %v548 = vmul.f32 %v538, %v543
        %v549 = vmul.f32 %v538, %v547
        %v550 = vadd.f32 %v534, %v548
        %v551 = vadd.f32 %v535, %v549
        %v552 = vld [vmem:[%s4] sm:$0xff]
        %554 = vset.pattern.permute.xlu0 0
        %555 = vperm.xlu0 %554, %v552
        %v556 = vpop.permute.xlu0 %555
        %v558 = vadd.f32 %v550, %v556
        %v559 = vadd.f32 %v551, %v556
        %v560 = vmax.f32 %v558, 0.0
        %v561 = vmax.f32 %v559, 0.0
        %v562 = vld [vmem:[%s5] sm:$0xf]
        %564 = vset.pattern.permute.xlu0 0
        %565 = vperm.xlu0 %564, %v562
        %v566 = vpop.permute.xlu0 %565
        %v568 = vlaneseq
        %v569 = vshrl.u32 %v568, 7
        %v570 = vsub.s32 0, %v569
        %v571 = vrot.slane %v560, %v570
        %v572 = vlaneseq
        %v573 = vshrl.u32 %v572, 7
        %v574 = vsub.s32 0, %v573
        %v575 = vrot.slane %v561, %v574
        %v576 = vmul.f32 %v566, %v571
        %v577 = vmul.f32 %v566, %v575
        %578 = vset.pattern.permute.xlu0 1
        %579 = vperm.xlu0 %578, %v562
        %v580 = vpop.permute.xlu0 %579
        %v582 = vlaneseq
        %v583 = vshrl.u32 %v582, 7
        %v584 = vsub.s32 1, %v583
        %v585 = vrot.slane %v560, %v584
        %v586 = vlaneseq
        %v587 = vshrl.u32 %v586, 7
        %v588 = vsub.s32 1, %v587
        %v589 = vrot.slane %v561, %v588
        %v590 = vmul.f32 %v580, %v585
        %v591 = vmul.f32 %v580, %v589
        %v592 = vadd.f32 %v576, %v590
        %v593 = vadd.f32 %v577, %v591
        %594 = vset.pattern.permute.xlu0 2
        %595 = vperm.xlu0 %594, %v562
        %v596 = vpop.permute.xlu0 %595
        %v598 = vlaneseq
        %v599 = vshrl.u32 %v598, 7
        %v600 = vsub.s32 2, %v599
        %v601 = vrot.slane %v560, %v600
        %v602 = vlaneseq
        %v603 = vshrl.u32 %v602, 7
        %v604 = vsub.s32 2, %v603
        %v605 = vrot.slane %v561, %v604
        %v606 = vmul.f32 %v596, %v601
        %v607 = vmul.f32 %v596, %v605
        %v608 = vadd.f32 %v592, %v606
        %v609 = vadd.f32 %v593, %v607
        %610 = vset.pattern.permute.xlu0 3
        %611 = vperm.xlu0 %610, %v562
        %v612 = vpop.permute.xlu0 %611
        %v614 = vlaneseq
        %v615 = vshrl.u32 %v614, 7
        %v616 = vsub.s32 3, %v615
        %v617 = vrot.slane %v560, %v616
        %v618 = vlaneseq
        %v619 = vshrl.u32 %v618, 7
        %v620 = vsub.s32 3, %v619
        %v621 = vrot.slane %v561, %v620
        %v622 = vmul.f32 %v612, %v617
        %v623 = vmul.f32 %v612, %v621
        %v624 = vadd.f32 %v608, %v622
        %v625 = vadd.f32 %v609, %v623
        %626 = vset.pattern.permute.xlu0 4
        %627 = vperm.xlu0 %626, %v562
        %v628 = vpop.permute.xlu0 %627
        %v630 = vlaneseq
        %v631 = vshrl.u32 %v630, 7
        %v632 = vsub.s32 4, %v631
        %v633 = vrot.slane %v560, %v632
        %v634 = vlaneseq
        %v635 = vshrl.u32 %v634, 7
        %v636 = vsub.s32 4, %v635
        %v637 = vrot.slane %v561, %v636
        %v638 = vmul.f32 %v628, %v633
        %v639 = vmul.f32 %v628, %v637
        %v640 = vadd.f32 %v624, %v638
        %v641 = vadd.f32 %v625, %v639
        %642 = vset.pattern.permute.xlu0 5
        %643 = vperm.xlu0 %642, %v562
        %v644 = vpop.permute.xlu0 %643
        %v646 = vlaneseq
        %v647 = vshrl.u32 %v646, 7
        %v648 = vsub.s32 5, %v647
        %v649 = vrot.slane %v560, %v648
        %v650 = vlaneseq
        %v651 = vshrl.u32 %v650, 7
        %v652 = vsub.s32 5, %v651
        %v653 = vrot.slane %v561, %v652
        %v654 = vmul.f32 %v644, %v649
        %v655 = vmul.f32 %v644, %v653
        %v656 = vadd.f32 %v640, %v654
        %v657 = vadd.f32 %v641, %v655
        %658 = vset.pattern.permute.xlu0 6
        %659 = vperm.xlu0 %658, %v562
        %v660 = vpop.permute.xlu0 %659
        %v662 = vlaneseq
        %v663 = vshrl.u32 %v662, 7
        %v664 = vsub.s32 6, %v663
        %v665 = vrot.slane %v560, %v664
        %v666 = vlaneseq
        %v667 = vshrl.u32 %v666, 7
        %v668 = vsub.s32 6, %v667
        %v669 = vrot.slane %v561, %v668
        %v670 = vmul.f32 %v660, %v665
        %v671 = vmul.f32 %v660, %v669
        %v672 = vadd.f32 %v656, %v670
        %v673 = vadd.f32 %v657, %v671
        %674 = vset.pattern.permute.xlu0 7
        %675 = vperm.xlu0 %674, %v562
        %v676 = vpop.permute.xlu0 %675
        %v678 = vlaneseq
        %v679 = vshrl.u32 %v678, 7
        %v680 = vsub.s32 7, %v679
        %v681 = vrot.slane %v560, %v680
        %v682 = vlaneseq
        %v683 = vshrl.u32 %v682, 7
        %v684 = vsub.s32 7, %v683
        %v685 = vrot.slane %v561, %v684
        %v686 = vmul.f32 %v676, %v681
        %v687 = vmul.f32 %v676, %v685
        %v688 = vadd.f32 %v672, %v686
        %v689 = vadd.f32 %v673, %v687
        %v690 = vld [vmem:[%s6] sm:$0xf]
        %692 = vset.pattern.permute.xlu0 0
        %693 = vperm.xlu0 %692, %v690
        %v694 = vpop.permute.xlu0 %693
        %v696 = vadd.f32 %v688, %v694
        %v697 = vadd.f32 %v689, %v694
        %v700 = vcombine.low %v696, %v697
        %702 = vst [vmem:[%s296] sm:$0xff] %v700
        %s703 = sand.u32 %s197, 1
        %s704 = scalar_lea.sflag [#allocation3], %s703
        %s705 = sand.u32 %s197, 1
        %s706 = smul.addr %s705, 8
        %s707 = scalar_lea.vmem [#allocation2], %s706
        // Predicated region
        $region49: #{mlp_flat.1} parent=47 // pred_check
          %p708 = pneg %p207
        $region50: #{mlp_flat.1} parent=47 // pred_check_branch
          %710 = sbr.rel (%p708) target = $region52
        $region51: #{mlp_flat.1} parent=47 // pred_region
          %s711 = smul.u32 2, %s26
          %s713 = ssub.s32 128, 128
          %714 = vsyncadd %s704, %s713
          %s715 = smul.addr %s25, 2
          %s716 = sadd.s32 %s711, %s715
          %s717 = smul.addr %s716, 64
          %s718 = scalar_lea.hbm %s7, %s717
          %s720 = sshll.u32 %s707, 4
          %s721 = int_to_ptr.vmem [resolvable:$true] %s720
          %723 = dma.vmem_to_hbm [thread:$0]  %s721, 128, %s718, %s704
        $region52: #{mlp_flat.1} parent=47 // pred_fallthru
          _
      $region48: #{mlp_flat.1} parent=5 // pred_fallthru
        _
      %p724 = scmp.le.s32.totalorder 2, %s16
      // Predicated region
      $region53: #{mlp_flat.1} parent=5 // pred_check
        %p725 = pneg %p724
      $region54: #{mlp_flat.1} parent=5 // pred_check_branch
        %727 = sbr.rel (%p725) target = $region56
      $region55: #{mlp_flat.1} parent=5 // pred_region
        %s728 = ssub.s32 %s16, 2
        // Predicated region
        $region57: #{mlp_flat.1} parent=55 // pred_check
          %p729 = pneg %p213
        $region58: #{mlp_flat.1} parent=55 // pred_check_branch
          %731 = sbr.rel (%p729) target = $region60
        $region59: #{mlp_flat.1} parent=55 // pred_region
          %s732 = sand.u32 %s198, 1
          %s733 = scalar_lea.sflag [#allocation3], %s732
          %s734 = sand.u32 %s198, 1
          %s735 = smul.addr %s734, 8
          %s736 = scalar_lea.vmem [#allocation2], %s735
          %737 = dma.done %s733, 128
        $region60: #{mlp_flat.1} parent=55 // pred_fallthru
          _
      $region56: #{mlp_flat.1} parent=5 // pred_fallthru
        _
    $region6: #{mlp_flat.1} parent=1 // loop_footer
      %s20 = sadd.s32 1, %s16
    $region7: #{mlp_flat.1} parent=1 // loop_footer_branch
      %15 = sbr.rel target = $region3
    $region8: #{mlp_flat.1} parent=1 // loop_exit
      _
    %738 = vsyncpa [#allocation3], 1
    %s739 = scalar_lea.sflag [#allocation3], 1
    %740 = vsyncpa %s739, 1

// kernel: mlp_flat.1
$region0: #{mlp_flat.1}
  #allocation0 [shape = 'u32[]', space=smem, size = 0x4, offset = 0x4, fixed_abs, tag = 'smem constant byte address 0x4 - core index']
  #allocation1 [shape = 'u32[144,128]{1,0:T(1,128)}', space=vmem, size = 0x12000, scoped, tag = 'internal scratch']
  %s0 = inlined_call_operand.vmem [shape: f32[2,4,256], index: 0, kind: input, shape index: {}]
  %s1 = inlined_call_operand.vmem [shape: f32[8,4], index: 1, kind: input, shape index: {}]
  %s2 = inlined_call_operand.vmem [shape: f32[8,1], index: 2, kind: input, shape index: {}]
  %s3 = inlined_call_operand.vmem [shape: f32[8,8], index: 3, kind: input, shape index: {}]
  %s4 = inlined_call_operand.vmem [shape: f32[8,1], index: 4, kind: input, shape index: {}]
  %s5 = inlined_call_operand.vmem [shape: f32[4,8], index: 5, kind: input, shape index: {}]
  %s6 = inlined_call_operand.vmem [shape: f32[4,1], index: 6, kind: input, shape index: {}]
  %s7 = inlined_call_operand.hbm [shape: f32[2,4,256], index: 7, kind: output, shape index: {}]
  %s8 = sld [smem:[#allocation0]]
  $region61: #{mlp_flat.1} parent=0
    _
  %s10 = ssub.s32 1, %s8
  %s11 = scalar_select 0, %s10, %s8
  $region1: #{mlp_flat.1} parent=0
    #allocation2 [shape = 'u8[8192]{0}', space=vmem, size = 0x2000, scoped, tag = 'output window, operand 0']
    #allocation3 [shape = 's32[2]{0}', space=sflag, size = 0x8, scoped, tag = 'scoped memory for mlp_flat.1']
    %12 = vsyncpa [#allocation3], 0
    %s13 = scalar_lea.sflag [#allocation3], 1
    %14 = vsyncpa %s13, 0
    loop: start=0, step=1, limit=4
    $region2: #{mlp_flat.1} parent=1 // loop_pre_header
      _
    $region3: #{mlp_flat.1} parent=1 // loop_header
      %s16 = sphi 0, %s20
      %p17 = scmp.ge.s32.totalorder %s16, 4
      %s23 = sphi 0, %s35
      %s24 = sphi 0, %s31
      %s25 = sphi 0, %s23
      %s26 = sphi 0, %s24
      %s27 = sphi 0, %s25
      %s28 = sphi 0, %s26
      %s40 = sphi 0, %s42
      %s43 = sphi 0, %s40
      %s44 = sphi 0, %s43
      %s60 = sphi 0, %s44
      %s64 = sphi 0, %s64
      %s66 = sphi 0, %s64
      %s67 = sphi 0, %s66
      %s81 = sphi 0, %s67
      %s85 = sphi 0, %s85
      %s87 = sphi 0, %s85
      %s88 = sphi 0, %s87
      %s102 = sphi 0, %s88
      %s106 = sphi 0, %s106
      %s108 = sphi 0, %s106
      %s109 = sphi 0, %s108
      %s123 = sphi 0, %s109
      %s127 = sphi 0, %s127
      %s129 = sphi 0, %s127
      %s130 = sphi 0, %s129
      %s144 = sphi 0, %s130
      %s148 = sphi 0, %s148
      %s150 = sphi 0, %s148
      %s151 = sphi 0, %s150
      %s165 = sphi 0, %s151
      %s169 = sphi 0, %s169
      %s171 = sphi 0, %s169
      %s172 = sphi 0, %s171
      %s186 = sphi 0, %s172
      %s194 = sphi 0, %s196
      %s197 = sphi 0, %s194
      %s198 = sphi 0, %s197
      %s214 = sphi 0, %s198
    $region4: #{mlp_flat.1} parent=1 // loop_header_branch
      %19 = sbr.rel (%p17) target = $region8
    $region5: #{mlp_flat.1} parent=1 // loop_body
      %s21 = ssub.s32 %s16, 1
      %s22 = ssub.s32 %s16, 2
      %s29 = sadd.s32 1, %s24
      %p30 = scmp.ge.s32.totalorder %s29, 1
      %s31 = scalar_select %p30, 0, %s29
      %s32 = sadd.s32 1, %s23
      %s33 = scalar_select %p30, %s32, %s23
      %p34 = scmp.ge.s32.totalorder %s33, 2
      %s35 = scalar_select %p34, 0, %s33
      %s36 = ssub.s32 %s23, %s35
      %s37 = ssub.s32 %s24, %s31
      %s38 = sor.u32 %s36, %s37
      %p39 = scmp.eq.s32.totalorder %s38, 0
      %s41 = sadd.s32 %s40, 1
      %s42 = scalar_select %p39, %s40, %s41
      %p45 = pneg %p39
      %p46 = scmp.eq.s32.totalorder %s16, 1
      %p47 = por %p45, %p46
      %p48 = scmp.ne.s32.totalorder %s40, %s43
      %p49 = scmp.eq.s32.totalorder %s16, 0
      %p50 = por %p48, %p49
      %p51 = scmp.ne.s32.totalorder %s40, %s43
      %p52 = scmp.eq.s32.totalorder %s21, 1
      %p53 = por %p51, %p52
      %p54 = scmp.ne.s32.totalorder %s43, %s44
      %p55 = scmp.eq.s32.totalorder %s21, 0
      %p56 = por %p54, %p55
      %p57 = scmp.ne.s32.totalorder %s43, %s44
      %p58 = scmp.eq.s32.totalorder %s22, 1
      %p59 = por %p57, %p58
      %p61 = scmp.ne.s32.totalorder %s44, %s60
      %p62 = scmp.eq.s32.totalorder %s22, 0
      %p63 = por %p61, %p62
      %s65 = sadd.s32 %s64, 1
      %p68 = scmp.eq.s32.totalorder %s16, 1
      %p69 = scmp.ne.s32.totalorder %s64, %s66
      %p70 = scmp.eq.s32.totalorder %s16, 0
      %p71 = por %p69, %p70
      %p72 = scmp.ne.s32.totalorder %s64, %s66
      %p73 = scmp.eq.s32.totalorder %s21, 1
      %p74 = por %p72, %p73
      %p75 = scmp.ne.s32.totalorder %s66, %s67
      %p76 = scmp.eq.s32.totalorder %s21, 0
      %p77 = por %p75, %p76
      %p78 = scmp.ne.s32.totalorder %s66, %s67
      %p79 = scmp.eq.s32.totalorder %s22, 1
      %p80 = por %p78, %p79
      %p82 = scmp.ne.s32.totalorder %s67, %s81
      %p83 = scmp.eq.s32.totalorder %s22, 0
      %p84 = por %p82, %p83
      %s86 = sadd.s32 %s85, 1
      %p89 = scmp.eq.s32.totalorder %s16, 1
      %p90 = scmp.ne.s32.totalorder %s85, %s87
      %p91 = scmp.eq.s32.totalorder %s16, 0
      %p92 = por %p90, %p91
      %p93 = scmp.ne.s32.totalorder %s85, %s87
      %p94 = scmp.eq.s32.totalorder %s21, 1
      %p95 = por %p93, %p94
      %p96 = scmp.ne.s32.totalorder %s87, %s88
      %p97 = scmp.eq.s32.totalorder %s21, 0
      %p98 = por %p96, %p97
      %p99 = scmp.ne.s32.totalorder %s87, %s88
      %p100 = scmp.eq.s32.totalorder %s22, 1
      %p101 = por %p99, %p100
      %p103 = scmp.ne.s32.totalorder %s88, %s102
      %p104 = scmp.eq.s32.totalorder %s22, 0
      %p105 = por %p103, %p104
      %s107 = sadd.s32 %s106, 1
      %p110 = scmp.eq.s32.totalorder %s16, 1
      %p111 = scmp.ne.s32.totalorder %s106, %s108
      %p112 = scmp.eq.s32.totalorder %s16, 0
      %p113 = por %p111, %p112
      %p114 = scmp.ne.s32.totalorder %s106, %s108
      %p115 = scmp.eq.s32.totalorder %s21, 1
      %p116 = por %p114, %p115
      %p117 = scmp.ne.s32.totalorder %s108, %s109
      %p118 = scmp.eq.s32.totalorder %s21, 0
      %p119 = por %p117, %p118
      %p120 = scmp.ne.s32.totalorder %s108, %s109
      %p121 = scmp.eq.s32.totalorder %s22, 1
      %p122 = por %p120, %p121
      %p124 = scmp.ne.s32.totalorder %s109, %s123
      %p125 = scmp.eq.s32.totalorder %s22, 0
      %p126 = por %p124, %p125
      %s128 = sadd.s32 %s127, 1
      %p131 = scmp.eq.s32.totalorder %s16, 1
      %p132 = scmp.ne.s32.totalorder %s127, %s129
      %p133 = scmp.eq.s32.totalorder %s16, 0
      %p134 = por %p132, %p133
      %p135 = scmp.ne.s32.totalorder %s127, %s129
      %p136 = scmp.eq.s32.totalorder %s21, 1
      %p137 = por %p135, %p136
      %p138 = scmp.ne.s32.totalorder %s129, %s130
      %p139 = scmp.eq.s32.totalorder %s21, 0
      %p140 = por %p138, %p139
      %p141 = scmp.ne.s32.totalorder %s129, %s130
      %p142 = scmp.eq.s32.totalorder %s22, 1
      %p143 = por %p141, %p142
      %p145 = scmp.ne.s32.totalorder %s130, %s144
      %p146 = scmp.eq.s32.totalorder %s22, 0
      %p147 = por %p145, %p146
      %s149 = sadd.s32 %s148, 1
      %p152 = scmp.eq.s32.totalorder %s16, 1
      %p153 = scmp.ne.s32.totalorder %s148, %s150
      %p154 = scmp.eq.s32.totalorder %s16, 0
      %p155 = por %p153, %p154
      %p156 = scmp.ne.s32.totalorder %s148, %s150
      %p157 = scmp.eq.s32.totalorder %s21, 1
      %p158 = por %p156, %p157
      %p159 = scmp.ne.s32.totalorder %s150, %s151
      %p160 = scmp.eq.s32.totalorder %s21, 0
      %p161 = por %p159, %p160
      %p162 = scmp.ne.s32.totalorder %s150, %s151
      %p163 = scmp.eq.s32.totalorder %s22, 1
      %p164 = por %p162, %p163
      %p166 = scmp.ne.s32.totalorder %s151, %s165
      %p167 = scmp.eq.s32.totalorder %s22, 0
      %p168 = por %p166, %p167
      %s170 = sadd.s32 %s169, 1
      %p173 = scmp.eq.s32.totalorder %s16, 1
      %p174 = scmp.ne.s32.totalorder %s169, %s171
      %p175 = scmp.eq.s32.totalorder %s16, 0
      %p176 = por %p174, %p175
      %p177 = scmp.ne.s32.totalorder %s169, %s171
      %p178 = scmp.eq.s32.totalorder %s21, 1
      %p179 = por %p177, %p178
      %p180 = scmp.ne.s32.totalorder %s171, %s172
      %p181 = scmp.eq.s32.totalorder %s21, 0
      %p182 = por %p180, %p181
      %p183 = scmp.ne.s32.totalorder %s171, %s172
      %p184 = scmp.eq.s32.totalorder %s22, 1
      %p185 = por %p183, %p184
      %p187 = scmp.ne.s32.totalorder %s172, %s186
      %p188 = scmp.eq.s32.totalorder %s22, 0
      %p189 = por %p187, %p188
      %s190 = ssub.s32 %s23, %s35
      %s191 = ssub.s32 %s24, %s31
      %s192 = sor.u32 %s190, %s191
      %p193 = scmp.eq.s32.totalorder %s192, 0
      %s195 = sadd.s32 %s194, 1
      %s196 = scalar_select %p193, %s194, %s195
      %p199 = pneg %p193
      %p200 = scmp.eq.s32.totalorder %s16, 1
      %p201 = por %p199, %p200
      %p202 = scmp.ne.s32.totalorder %s194, %s197
      %p203 = scmp.eq.s32.totalorder %s16, 0
      %p204 = por %p202, %p203
      %p205 = scmp.ne.s32.totalorder %s194, %s197
      %p206 = scmp.eq.s32.totalorder %s21, 1
      %p207 = por %p205, %p206
      %p208 = scmp.ne.s32.totalorder %s197, %s198
      %p209 = scmp.eq.s32.totalorder %s21, 0
      %p210 = por %p208, %p209
      %p211 = scmp.ne.s32.totalorder %s197, %s198
      %p212 = scmp.eq.s32.totalorder %s22, 1
      %p213 = por %p211, %p212
      %p215 = scmp.ne.s32.totalorder %s198, %s214
      %p216 = scmp.eq.s32.totalorder %s22, 0
      %p217 = por %p215, %p216
      %p218 = scmp.le.s32.totalorder 1, %s16
      %p219 = scmp.lt.s32.totalorder %s16, 3
      %p220 = pnand %p218, %p219
      %p221 = pneg %p220
      // Predicated region
      $region9: #{mlp_flat.1} parent=5 // pred_check
        _
      $region10: #{mlp_flat.1} parent=5 // pred_check_branch
        %223 = sbr.rel (%p220) target = $region12
      $region11: #{mlp_flat.1} parent=5 // pred_region
        %s224 = ssub.s32 %s16, 1
        // Predicated region
        $region13: #{mlp_flat.1} parent=11 // pred_check
          %p225 = pneg %p77
        $region14: #{mlp_flat.1} parent=11 // pred_check_branch
          %227 = sbr.rel (%p225) target = $region16
        $region15: #{mlp_flat.1} parent=11 // pred_region
          _
        $region16: #{mlp_flat.1} parent=11 // pred_fallthru
          _
        // Predicated region
        $region17: #{mlp_flat.1} parent=11 // pred_check
          %p228 = pneg %p98
        $region18: #{mlp_flat.1} parent=11 // pred_check_branch
          %230 = sbr.rel (%p228) target = $region20
        $region19: #{mlp_flat.1} parent=11 // pred_region
          _
        $region20: #{mlp_flat.1} parent=11 // pred_fallthru
          _
        // Predicated region
        $region21: #{mlp_flat.1} parent=11 // pred_check
          %p231 = pneg %p119
        $region22: #{mlp_flat.1} parent=11 // pred_check_branch
          %233 = sbr.rel (%p231) target = $region24
        $region23: #{mlp_flat.1} parent=11 // pred_region
          _
        $region24: #{mlp_flat.1} parent=11 // pred_fallthru
          _
        // Predicated region
        $region25: #{mlp_flat.1} parent=11 // pred_check
          %p234 = pneg %p140
        $region26: #{mlp_flat.1} parent=11 // pred_check_branch
          %236 = sbr.rel (%p234) target = $region28
        $region27: #{mlp_flat.1} parent=11 // pred_region
          _
        $region28: #{mlp_flat.1} parent=11 // pred_fallthru
          _
        // Predicated region
        $region29: #{mlp_flat.1} parent=11 // pred_check
          %p237 = pneg %p161
        $region30: #{mlp_flat.1} parent=11 // pred_check_branch
          %239 = sbr.rel (%p237) target = $region32
        $region31: #{mlp_flat.1} parent=11 // pred_region
          _
        $region32: #{mlp_flat.1} parent=11 // pred_fallthru
          _
        // Predicated region
        $region33: #{mlp_flat.1} parent=11 // pred_check
          %p240 = pneg %p182
        $region34: #{mlp_flat.1} parent=11 // pred_check_branch
          %242 = sbr.rel (%p240) target = $region36
        $region35: #{mlp_flat.1} parent=11 // pred_region
          _
        $region36: #{mlp_flat.1} parent=11 // pred_fallthru
          _
      $region12: #{mlp_flat.1} parent=5 // pred_fallthru
        _
      %p243 = scmp.lt.s32.totalorder %s16, 2
      // Predicated region
      $region37: #{mlp_flat.1} parent=5 // pred_check
        %p244 = pneg %p243
      $region38: #{mlp_flat.1} parent=5 // pred_check_branch
        %246 = sbr.rel (%p244) target = $region40
      $region39: #{mlp_flat.1} parent=5 // pred_region
        // Predicated region
        $region41: #{mlp_flat.1} parent=39 // pred_check
          %p247 = pneg %p50
        $region42: #{mlp_flat.1} parent=39 // pred_check_branch
          %249 = sbr.rel (%p247) target = $region44
        $region43: #{mlp_flat.1} parent=39 // pred_region
          %s250 = smul.u32 2, %s24
          %p251 = scmp.lt.s32.totalorder %s23, 1
          %s252 = scalar_select %p251, %s23, 1
          %p253 = scmp.lt.s32.totalorder %s250, 1
          %s254 = scalar_select %p253, %s250, 1
          %s255 = smul.addr %s252, 2
          %s256 = sadd.s32 %s254, %s255
          %s257 = smul.addr %s256, 4
          %s258 = scalar_lea.vmem %s0, %s257
          %s259 = smul.u32 2, %s24
        $region44: #{mlp_flat.1} parent=39 // pred_fallthru
          _
      $region40: #{mlp_flat.1} parent=5 // pred_fallthru
        _
      %p260 = scmp.le.s32.totalorder 1, %s16
      %p261 = scmp.lt.s32.totalorder %s16, 3
      %p262 = pnand %p260, %p261
      %p263 = pneg %p262
      // Predicated region
      $region45: #{mlp_flat.1} parent=5 // pred_check
        _
      $region46: #{mlp_flat.1} parent=5 // pred_check_branch
        %265 = sbr.rel (%p262) target = $region48
      $region47: #{mlp_flat.1} parent=5 // pred_region
        %s266 = ssub.s32 %s16, 1
        %s267 = smul.u32 2, %s26
        %p268 = scmp.lt.s32.totalorder %s25, 1
        %s269 = scalar_select %p268, %s25, 1
        %p270 = scmp.lt.s32.totalorder %s267, 1
        %s271 = scalar_select %p270, %s267, 1
        %s272 = smul.addr %s269, 2
        %s273 = sadd.s32 %s271, %s272
        %s274 = smul.addr %s273, 4
        %s275 = scalar_lea.vmem %s0, %s274
        %p276 = pneg %p56
        %p277 = pneg %p53
        %p278 = pneg %p77
        %p279 = pneg %p74
        %p280 = pneg %p98
        %p281 = pneg %p95
        %p282 = pneg %p119
        %p283 = pneg %p116
        %p284 = pneg %p140
        %p285 = pneg %p137
        %p286 = pneg %p161
        %p287 = pneg %p158
        %p288 = pneg %p182
        %p289 = pneg %p179
        %p290 = pneg %p210
        %p291 = pneg %p207
        %s292 = sand.u32 %s197, 1
        %s293 = scalar_lea.sflag [#allocation3], %s292
        %s294 = sand.u32 %s197, 1
        %s295 = smul.addr %s294, 8
        %s296 = scalar_lea.vmem [#allocation2], %s295
        %s297 = smul.u32 2, %s26
        %p298 = scmp.lt.s32.totalorder %s25, 1
        %s299 = scalar_select %p298, %s25, 1
        %p300 = scmp.lt.s32.totalorder %s297, 1
        %s301 = scalar_select %p300, %s297, 1
        %s302 = smul.addr %s299, 2
        %s303 = sadd.s32 %s301, %s302
        %s304 = smul.addr %s303, 4
        %s305 = scalar_lea.vmem %s0, %s304
        %s306 = smul.u32 2, %s26
        %s307 = smul.u32 2, %s26
        %v308 = vld [vmem:[%s305] sm:$0xff]
        %v309 = vld [vmem:[%s1] sm:$0xff]
        %311 = vset.pattern.permute.xlu0 0
        %312 = vperm.xlu0 %311, %v309
        %v313 = vpop.permute.xlu0 %312
        %v316 = vlaneseq
        %v317 = vshrl.u32 %v316, 7
        %v318 = vsub.s32 0, %v317
        %v319 = vrot.slane %v308, %v318
        %v320 = vlaneseq
        %v321 = vshrl.u32 %v320, 7
        %v322 = vsub.s32 4, %v321
        %v323 = vrot.slane %v308, %v322
        %v326 = vlaneseq
        %v327 = vshrl.u32 %v326, 7
        %v328 = vsub.s32 0, %v327
        %v329 = vrot.slane %v319, %v328
        %v330 = vlaneseq
        %v331 = vshrl.u32 %v330, 7
        %v332 = vsub.s32 0, %v331
        %v333 = vrot.slane %v323, %v332
        %v334 = vmul.f32 %v313, %v329
        %v335 = vmul.f32 %v313, %v333
        %336 = vset.pattern.permute.xlu0 1
        %337 = vperm.xlu0 %336, %v309
        %v338 = vpop.permute.xlu0 %337
        %v340 = vlaneseq
        %v341 = vshrl.u32 %v340, 7
        %v342 = vsub.s32 1, %v341
        %v343 = vrot.slane %v308, %v342
        %v344 = vlaneseq
        %v345 = vshrl.u32 %v344, 7
        %v346 = vsub.s32 5, %v345
        %v347 = vrot.slane %v308, %v346
        %v350 = vlaneseq
        %v351 = vshrl.u32 %v350, 7
        %v352 = vsub.s32 1, %v351
        %v353 = vrot.slane %v343, %v352
        %v354 = vlaneseq
        %v355 = vshrl.u32 %v354, 7
        %v356 = vsub.s32 1, %v355
        %v357 = vrot.slane %v347, %v356
        %v358 = vmul.f32 %v338, %v353
        %v359 = vmul.f32 %v338, %v357
        %v360 = vadd.f32 %v334, %v358
        %v361 = vadd.f32 %v335, %v359
        %362 = vset.pattern.permute.xlu0 2
        %363 = vperm.xlu0 %362, %v309
        %v364 = vpop.permute.xlu0 %363
        %v366 = vlaneseq
        %v367 = vshrl.u32 %v366, 7
        %v368 = vsub.s32 2, %v367
        %v369 = vrot.slane %v308, %v368
        %v370 = vlaneseq
        %v371 = vshrl.u32 %v370, 7
        %v372 = vsub.s32 6, %v371
        %v373 = vrot.slane %v308, %v372
        %v376 = vlaneseq
        %v377 = vshrl.u32 %v376, 7
        %v378 = vsub.s32 2, %v377
        %v379 = vrot.slane %v369, %v378
        %v380 = vlaneseq
        %v381 = vshrl.u32 %v380, 7
        %v382 = vsub.s32 2, %v381
        %v383 = vrot.slane %v373, %v382
        %v384 = vmul.f32 %v364, %v379
        %v385 = vmul.f32 %v364, %v383
        %v386 = vadd.f32 %v360, %v384
        %v387 = vadd.f32 %v361, %v385
        %388 = vset.pattern.permute.xlu0 3
        %389 = vperm.xlu0 %388, %v309
        %v390 = vpop.permute.xlu0 %389
        %v392 = vlaneseq
        %v393 = vshrl.u32 %v392, 7
        %v394 = vsub.s32 3, %v393
        %v395 = vrot.slane %v308, %v394
        %v396 = vlaneseq
        %v397 = vshrl.u32 %v396, 7
        %v398 = vsub.s32 7, %v397
        %v399 = vrot.slane %v308, %v398
        %v402 = vlaneseq
        %v403 = vshrl.u32 %v402, 7
        %v404 = vsub.s32 3, %v403
        %v405 = vrot.slane %v395, %v404
        %v406 = vlaneseq
        %v407 = vshrl.u32 %v406, 7
        %v408 = vsub.s32 3, %v407
        %v409 = vrot.slane %v399, %v408
        %v410 = vmul.f32 %v390, %v405
        %v411 = vmul.f32 %v390, %v409
        %v412 = vadd.f32 %v386, %v410
        %v413 = vadd.f32 %v387, %v411
        %v414 = vld [vmem:[%s2] sm:$0xff]
        %416 = vset.pattern.permute.xlu0 0
        %417 = vperm.xlu0 %416, %v414
        %v418 = vpop.permute.xlu0 %417
        %v420 = vadd.f32 %v412, %v418
        %v421 = vadd.f32 %v413, %v418
        %v422 = vmax.f32 %v420, 0.0
        %v423 = vmax.f32 %v421, 0.0
        %v424 = vld [vmem:[%s3] sm:$0xff]
        %426 = vset.pattern.permute.xlu0 0
        %427 = vperm.xlu0 %426, %v424
        %v428 = vpop.permute.xlu0 %427
        %v430 = vlaneseq
        %v431 = vshrl.u32 %v430, 7
        %v432 = vsub.s32 0, %v431
        %v433 = vrot.slane %v422, %v432
        %v434 = vlaneseq
        %v435 = vshrl.u32 %v434, 7
        %v436 = vsub.s32 0, %v435
        %v437 = vrot.slane %v423, %v436
        %v438 = vmul.f32 %v428, %v433
        %v439 = vmul.f32 %v428, %v437
        %440 = vset.pattern.permute.xlu0 1
        %441 = vperm.xlu0 %440, %v424
        %v442 = vpop.permute.xlu0 %441
        %v444 = vlaneseq
        %v445 = vshrl.u32 %v444, 7
        %v446 = vsub.s32 1, %v445
        %v447 = vrot.slane %v422, %v446
        %v448 = vlaneseq
        %v449 = vshrl.u32 %v448, 7
        %v450 = vsub.s32 1, %v449
        %v451 = vrot.slane %v423, %v450
        %v452 = vmul.f32 %v442, %v447
        %v453 = vmul.f32 %v442, %v451
        %v454 = vadd.f32 %v438, %v452
        %v455 = vadd.f32 %v439, %v453
        %456 = vset.pattern.permute.xlu0 2
        %457 = vperm.xlu0 %456, %v424
        %v458 = vpop.permute.xlu0 %457
        %v460 = vlaneseq
        %v461 = vshrl.u32 %v460, 7
        %v462 = vsub.s32 2, %v461
        %v463 = vrot.slane %v422, %v462
        %v464 = vlaneseq
        %v465 = vshrl.u32 %v464, 7
        %v466 = vsub.s32 2, %v465
        %v467 = vrot.slane %v423, %v466
        %v468 = vmul.f32 %v458, %v463
        %v469 = vmul.f32 %v458, %v467
        %v470 = vadd.f32 %v454, %v468
        %v471 = vadd.f32 %v455, %v469
        %472 = vset.pattern.permute.xlu0 3
        %473 = vperm.xlu0 %472, %v424
        %v474 = vpop.permute.xlu0 %473
        %v476 = vlaneseq
        %v477 = vshrl.u32 %v476, 7
        %v478 = vsub.s32 3, %v477
        %v479 = vrot.slane %v422, %v478
        %v480 = vlaneseq
        %v481 = vshrl.u32 %v480, 7
        %v482 = vsub.s32 3, %v481
        %v483 = vrot.slane %v423, %v482
        %v484 = vmul.f32 %v474, %v479
        %v485 = vmul.f32 %v474, %v483
        %v486 = vadd.f32 %v470, %v484
        %v487 = vadd.f32 %v471, %v485
        %488 = vset.pattern.permute.xlu0 4
        %489 = vperm.xlu0 %488, %v424
        %v490 = vpop.permute.xlu0 %489
        %v492 = vlaneseq
        %v493 = vshrl.u32 %v492, 7
        %v494 = vsub.s32 4, %v493
        %v495 = vrot.slane %v422, %v494
        %v496 = vlaneseq
        %v497 = vshrl.u32 %v496, 7
        %v498 = vsub.s32 4, %v497
        %v499 = vrot.slane %v423, %v498
        %v500 = vmul.f32 %v490, %v495
        %v501 = vmul.f32 %v490, %v499
        %v502 = vadd.f32 %v486, %v500
        %v503 = vadd.f32 %v487, %v501
        %504 = vset.pattern.permute.xlu0 5
        %505 = vperm.xlu0 %504, %v424
        %v506 = vpop.permute.xlu0 %505
        %v508 = vlaneseq
        %v509 = vshrl.u32 %v508, 7
        %v510 = vsub.s32 5, %v509
        %v511 = vrot.slane %v422, %v510
        %v512 = vlaneseq
        %v513 = vshrl.u32 %v512, 7
        %v514 = vsub.s32 5, %v513
        %v515 = vrot.slane %v423, %v514
        %v516 = vmul.f32 %v506, %v511
        %v517 = vmul.f32 %v506, %v515
        %v518 = vadd.f32 %v502, %v516
        %v519 = vadd.f32 %v503, %v517
        %520 = vset.pattern.permute.xlu0 6
        %521 = vperm.xlu0 %520, %v424
        %v522 = vpop.permute.xlu0 %521
        %v524 = vlaneseq
        %v525 = vshrl.u32 %v524, 7
        %v526 = vsub.s32 6, %v525
        %v527 = vrot.slane %v422, %v526
        %v528 = vlaneseq
        %v529 = vshrl.u32 %v528, 7
        %v530 = vsub.s32 6, %v529
        %v531 = vrot.slane %v423, %v530
        %v532 = vmul.f32 %v522, %v527
        %v533 = vmul.f32 %v522, %v531
        %v534 = vadd.f32 %v518, %v532
        %v535 = vadd.f32 %v519, %v533
        %536 = vset.pattern.permute.xlu0 7
        %537 = vperm.xlu0 %536, %v424
        %v538 = vpop.permute.xlu0 %537
        %v540 = vlaneseq
        %v541 = vshrl.u32 %v540, 7
        %v542 = vsub.s32 7, %v541
        %v543 = vrot.slane %v422, %v542
        %v544 = vlaneseq
        %v545 = vshrl.u32 %v544, 7
        %v546 = vsub.s32 7, %v545
        %v547 = vrot.slane %v423, %v546
        %v548 = vmul.f32 %v538, %v543
        %v549 = vmul.f32 %v538, %v547
        %v550 = vadd.f32 %v534, %v548
        %v551 = vadd.f32 %v535, %v549
        %v552 = vld [vmem:[%s4] sm:$0xff]
        %554 = vset.pattern.permute.xlu0 0
        %555 = vperm.xlu0 %554, %v552
        %v556 = vpop.permute.xlu0 %555
        %v558 = vadd.f32 %v550, %v556
        %v559 = vadd.f32 %v551, %v556
        %v560 = vmax.f32 %v558, 0.0
        %v561 = vmax.f32 %v559, 0.0
        %v562 = vld [vmem:[%s5] sm:$0xf]
        %564 = vset.pattern.permute.xlu0 0
        %565 = vperm.xlu0 %564, %v562
        %v566 = vpop.permute.xlu0 %565
        %v568 = vlaneseq
        %v569 = vshrl.u32 %v568, 7
        %v570 = vsub.s32 0, %v569
        %v571 = vrot.slane %v560, %v570
        %v572 = vlaneseq
        %v573 = vshrl.u32 %v572, 7
        %v574 = vsub.s32 0, %v573
        %v575 = vrot.slane %v561, %v574
        %v576 = vmul.f32 %v566, %v571
        %v577 = vmul.f32 %v566, %v575
        %578 = vset.pattern.permute.xlu0 1
        %579 = vperm.xlu0 %578, %v562
        %v580 = vpop.permute.xlu0 %579
        %v582 = vlaneseq
        %v583 = vshrl.u32 %v582, 7
        %v584 = vsub.s32 1, %v583
        %v585 = vrot.slane %v560, %v584
        %v586 = vlaneseq
        %v587 = vshrl.u32 %v586, 7
        %v588 = vsub.s32 1, %v587
        %v589 = vrot.slane %v561, %v588
        %v590 = vmul.f32 %v580, %v585
        %v591 = vmul.f32 %v580, %v589
        %v592 = vadd.f32 %v576, %v590
        %v593 = vadd.f32 %v577, %v591
        %594 = vset.pattern.permute.xlu0 2
        %595 = vperm.xlu0 %594, %v562
        %v596 = vpop.permute.xlu0 %595
        %v598 = vlaneseq
        %v599 = vshrl.u32 %v598, 7
        %v600 = vsub.s32 2, %v599
        %v601 = vrot.slane %v560, %v600
        %v602 = vlaneseq
        %v603 = vshrl.u32 %v602, 7
        %v604 = vsub.s32 2, %v603
        %v605 = vrot.slane %v561, %v604
        %v606 = vmul.f32 %v596, %v601
        %v607 = vmul.f32 %v596, %v605
        %v608 = vadd.f32 %v592, %v606
        %v609 = vadd.f32 %v593, %v607
        %610 = vset.pattern.permute.xlu0 3
        %611 = vperm.xlu0 %610, %v562
        %v612 = vpop.permute.xlu0 %611
        %v614 = vlaneseq
        %v615 = vshrl.u32 %v614, 7
        %v616 = vsub.s32 3, %v615
        %v617 = vrot.slane %v560, %v616
        %v618 = vlaneseq
        %v619 = vshrl.u32 %v618, 7
        %v620 = vsub.s32 3, %v619
        %v621 = vrot.slane %v561, %v620
        %v622 = vmul.f32 %v612, %v617
        %v623 = vmul.f32 %v612, %v621
        %v624 = vadd.f32 %v608, %v622
        %v625 = vadd.f32 %v609, %v623
        %626 = vset.pattern.permute.xlu0 4
        %627 = vperm.xlu0 %626, %v562
        %v628 = vpop.permute.xlu0 %627
        %v630 = vlaneseq
        %v631 = vshrl.u32 %v630, 7
        %v632 = vsub.s32 4, %v631
        %v633 = vrot.slane %v560, %v632
        %v634 = vlaneseq
        %v635 = vshrl.u32 %v634, 7
        %v636 = vsub.s32 4, %v635
        %v637 = vrot.slane %v561, %v636
        %v638 = vmul.f32 %v628, %v633
        %v639 = vmul.f32 %v628, %v637
        %v640 = vadd.f32 %v624, %v638
        %v641 = vadd.f32 %v625, %v639
        %642 = vset.pattern.permute.xlu0 5
        %643 = vperm.xlu0 %642, %v562
        %v644 = vpop.permute.xlu0 %643
        %v646 = vlaneseq
        %v647 = vshrl.u32 %v646, 7
        %v648 = vsub.s32 5, %v647
        %v649 = vrot.slane %v560, %v648
        %v650 = vlaneseq
        %v651 = vshrl.u32 %v650, 7
        %v652 = vsub.s32 5, %v651
        %v653 = vrot.slane %v561, %v652
        %v654 = vmul.f32 %v644, %v649
        %v655 = vmul.f32 %v644, %v653
        %v656 = vadd.f32 %v640, %v654
        %v657 = vadd.f32 %v641, %v655
        %658 = vset.pattern.permute.xlu0 6
        %659 = vperm.xlu0 %658, %v562
        %v660 = vpop.permute.xlu0 %659
        %v662 = vlaneseq
        %v663 = vshrl.u32 %v662, 7
        %v664 = vsub.s32 6, %v663
        %v665 = vrot.slane %v560, %v664
        %v666 = vlaneseq
        %v667 = vshrl.u32 %v666, 7
        %v668 = vsub.s32 6, %v667
        %v669 = vrot.slane %v561, %v668
        %v670 = vmul.f32 %v660, %v665
        %v671 = vmul.f32 %v660, %v669
        %v672 = vadd.f32 %v656, %v670
        %v673 = vadd.f32 %v657, %v671
        %674 = vset.pattern.permute.xlu0 7
        %675 = vperm.xlu0 %674, %v562
        %v676 = vpop.permute.xlu0 %675
        %v678 = vlaneseq
        %v679 = vshrl.u32 %v678, 7
        %v680 = vsub.s32 7, %v679
        %v681 = vrot.slane %v560, %v680
        %v682 = vlaneseq
        %v683 = vshrl.u32 %v682, 7
        %v684 = vsub.s32 7, %v683
        %v685 = vrot.slane %v561, %v684
        %v686 = vmul.f32 %v676, %v681
        %v687 = vmul.f32 %v676, %v685
        %v688 = vadd.f32 %v672, %v686
        %v689 = vadd.f32 %v673, %v687
        %v690 = vld [vmem:[%s6] sm:$0xf]
        %692 = vset.pattern.permute.xlu0 0
        %693 = vperm.xlu0 %692, %v690
        %v694 = vpop.permute.xlu0 %693
        %v696 = vadd.f32 %v688, %v694
        %v697 = vadd.f32 %v689, %v694
        %v700 = vcombine.low %v696, %v697
        %702 = vst [vmem:[%s296] sm:$0xff] %v700
        %s703 = sand.u32 %s197, 1
        %s704 = scalar_lea.sflag [#allocation3], %s703
        %s705 = sand.u32 %s197, 1
        %s706 = smul.addr %s705, 8
        %s707 = scalar_lea.vmem [#allocation2], %s706
        // Predicated region
        $region49: #{mlp_flat.1} parent=47 // pred_check
          %p708 = pneg %p207
        $region50: #{mlp_flat.1} parent=47 // pred_check_branch
          %710 = sbr.rel (%p708) target = $region52
        $region51: #{mlp_flat.1} parent=47 // pred_region
          %s711 = smul.u32 2, %s26
          %s713 = ssub.s32 128, 128
          %714 = vsyncadd %s704, %s713
          %s715 = smul.addr %s25, 2
          %s716 = sadd.s32 %s711, %s715
          %s717 = smul.addr %s716, 64
          %s718 = scalar_lea.hbm %s7, %s717
          %s720 = sshll.u32 %s707, 4
          %s721 = int_to_ptr.vmem [resolvable:$true] %s720
          %723 = dma.vmem_to_hbm [thread:$0]  %s721, 128, %s718, %s704
        $region52: #{mlp_flat.1} parent=47 // pred_fallthru
          _
      $region48: #{mlp_flat.1} parent=5 // pred_fallthru
        _
      %p724 = scmp.le.s32.totalorder 2, %s16
      // Predicated region
      $region53: #{mlp_flat.1} parent=5 // pred_check
        %p725 = pneg %p724
      $region54: #{mlp_flat.1} parent=5 // pred_check_branch
        %727 = sbr.rel (%p725) target = $region56
      $region55: #{mlp_flat.1} parent=5 // pred_region
        %s728 = ssub.s32 %s16, 2
        // Predicated region
        $region57: #{mlp_flat.1} parent=55 // pred_check
          %p729 = pneg %p213
        $region58: #{mlp_flat.1} parent=55 // pred_check_branch
          %731 = sbr.rel (%p729) target = $region60
        $region59: #{mlp_flat.1} parent=55 // pred_region
          %s732 = sand.u32 %s198, 1
          %s733 = scalar_lea.sflag [#allocation3], %s732
          %s734 = sand.u32 %s198, 1
          %s735 = smul.addr %s734, 8
          %s736 = scalar_lea.vmem [#allocation2], %s735
          %737 = dma.done %s733, 128
        $region60: #{mlp_flat.1} parent=55 // pred_fallthru
          _
      $region56: #{mlp_flat.1} parent=5 // pred_fallthru
        _
    $region6: #{mlp_flat.1} parent=1 // loop_footer
      %s20 = sadd.s32 1, %s16
    $region7: #{mlp_flat.1} parent=1 // loop_footer_branch
      %15 = sbr.rel target = $region3
    $region8: #{mlp_flat.1} parent=1 // loop_exit
      _
    %738 = vsyncpa [#allocation3], 1
    %s739 = scalar_lea.sflag [#allocation3], 1
    %740 = vsyncpa %s739, 1

// kernel: mlp_flat.1
$region0: #{mlp_flat.1}
  #allocation0 [shape = 'u32[]', space=smem, size = 0x4, offset = 0x4, fixed_abs, tag = 'smem constant byte address 0x4 - core index']
  #allocation1 [shape = 'u32[144,128]{1,0:T(1,128)}', space=vmem, size = 0x12000, scoped, tag = 'internal scratch']
  %s0 = inlined_call_operand.vmem [shape: f32[2,4,256], index: 0, kind: input, shape index: {}]
  %s1 = inlined_call_operand.vmem [shape: f32[8,4], index: 1, kind: input, shape index: {}]
  %s2 = inlined_call_operand.vmem [shape: f32[8,1], index: 2, kind: input, shape index: {}]
  %s3 = inlined_call_operand.vmem [shape: f32[8,8], index: 3, kind: input, shape index: {}]
  %s4 = inlined_call_operand.vmem [shape: f32[8,1], index: 4, kind: input, shape index: {}]
  %s5 = inlined_call_operand.vmem [shape: f32[4,8], index: 5, kind: input, shape index: {}]
  %s6 = inlined_call_operand.vmem [shape: f32[4,1], index: 6, kind: input, shape index: {}]
  %s7 = inlined_call_operand.hbm [shape: f32[2,4,256], index: 7, kind: output, shape index: {}]
  %s8 = sld [smem:[#allocation0]]
  $region61: #{mlp_flat.1} parent=0
    _
  %s10 = ssub.s32 1, %s8
  %s11 = scalar_select 0, %s10, %s8
  $region1: #{mlp_flat.1} parent=0
    #allocation2 [shape = 'u8[8192]{0}', space=vmem, size = 0x2000, scoped, tag = 'output window, operand 0']
    #allocation3 [shape = 's32[2]{0}', space=sflag, size = 0x8, scoped, tag = 'scoped memory for mlp_flat.1']
    %12 = vsyncpa [#allocation3], 0
    %s13 = scalar_lea.sflag [#allocation3], 1
    %14 = vsyncpa %s13, 0
    loop: start=0, step=1, limit=4
    $region2: #{mlp_flat.1} parent=1 // loop_pre_header
      _
    $region3: #{mlp_flat.1} parent=1 // loop_header
      %s16 = sphi 0, %s20
      %p17 = scmp.ge.s32.totalorder %s16, 4
      %s23 = sphi 0, %s35
      %s24 = sphi 0, %s31
      %s25 = sphi 0, %s23
      %s26 = sphi 0, %s24
      %s27 = sphi 0, %s25
      %s28 = sphi 0, %s26
      %s40 = sphi 0, %s42
      %s43 = sphi 0, %s40
      %s44 = sphi 0, %s43
      %s60 = sphi 0, %s44
      %s64 = sphi 0, %s64
      %s66 = sphi 0, %s64
      %s67 = sphi 0, %s66
      %s81 = sphi 0, %s67
      %s85 = sphi 0, %s85
      %s87 = sphi 0, %s85
      %s88 = sphi 0, %s87
      %s102 = sphi 0, %s88
      %s106 = sphi 0, %s106
      %s108 = sphi 0, %s106
      %s109 = sphi 0, %s108
      %s123 = sphi 0, %s109
      %s127 = sphi 0, %s127
      %s129 = sphi 0, %s127
      %s130 = sphi 0, %s129
      %s144 = sphi 0, %s130
      %s148 = sphi 0, %s148
      %s150 = sphi 0, %s148
      %s151 = sphi 0, %s150
      %s165 = sphi 0, %s151
      %s169 = sphi 0, %s169
      %s171 = sphi 0, %s169
      %s172 = sphi 0, %s171
      %s186 = sphi 0, %s172
      %s194 = sphi 0, %s196
      %s197 = sphi 0, %s194
      %s198 = sphi 0, %s197
      %s214 = sphi 0, %s198
    $region4: #{mlp_flat.1} parent=1 // loop_header_branch
      %19 = sbr.rel (%p17) target = $region8
    $region5: #{mlp_flat.1} parent=1 // loop_body
      %s21 = ssub.s32 %s16, 1
      %s22 = ssub.s32 %s16, 2
      %s29 = sadd.s32 1, %s24
      %p30 = scmp.ge.s32.totalorder %s29, 1
      %s31 = scalar_select %p30, 0, %s29
      %s32 = sadd.s32 1, %s23
      %s33 = scalar_select %p30, %s32, %s23
      %p34 = scmp.ge.s32.totalorder %s33, 2
      %s35 = scalar_select %p34, 0, %s33
      %s36 = ssub.s32 %s23, %s35
      %s37 = ssub.s32 %s24, %s31
      %s38 = sor.u32 %s36, %s37
      %p39 = scmp.eq.s32.totalorder %s38, 0
      %s41 = sadd.s32 %s40, 1
      %s42 = scalar_select %p39, %s40, %s41
      %p45 = pneg %p39
      %p46 = scmp.eq.s32.totalorder %s16, 1
      %p47 = por %p45, %p46
      %p48 = scmp.ne.s32.totalorder %s40, %s43
      %p49 = scmp.eq.s32.totalorder %s16, 0
      %p50 = por %p48, %p49
      %p51 = scmp.ne.s32.totalorder %s40, %s43
      %p52 = scmp.eq.s32.totalorder %s21, 1
      %p53 = por %p51, %p52
      %p54 = scmp.ne.s32.totalorder %s43, %s44
      %p55 = scmp.eq.s32.totalorder %s21, 0
      %p56 = por %p54, %p55
      %p57 = scmp.ne.s32.totalorder %s43, %s44
      %p58 = scmp.eq.s32.totalorder %s22, 1
      %p59 = por %p57, %p58
      %p61 = scmp.ne.s32.totalorder %s44, %s60
      %p62 = scmp.eq.s32.totalorder %s22, 0
      %p63 = por %p61, %p62
      %s65 = sadd.s32 %s64, 1
      %p68 = scmp.eq.s32.totalorder %s16, 1
      %p69 = scmp.ne.s32.totalorder %s64, %s66
      %p70 = scmp.eq.s32.totalorder %s16, 0
      %p71 = por %p69, %p70
      %p72 = scmp.ne.s32.totalorder %s64, %s66
      %p73 = scmp.eq.s32.totalorder %s21, 1
      %p74 = por %p72, %p73
      %p75 = scmp.ne.s32.totalorder %s66, %s67
      %p76 = scmp.eq.s32.totalorder %s21, 0
      %p77 = por %p75, %p76
      %p78 = scmp.ne.s32.totalorder %s66, %s67
      %p79 = scmp.eq.s32.totalorder %s22, 1
      %p80 = por %p78, %p79
      %p82 = scmp.ne.s32.totalorder %s67, %s81
      %p83 = scmp.eq.s32.totalorder %s22, 0
      %p84 = por %p82, %p83
      %s86 = sadd.s32 %s85, 1
      %p89 = scmp.eq.s32.totalorder %s16, 1
      %p90 = scmp.ne.s32.totalorder %s85, %s87
      %p91 = scmp.eq.s32.totalorder %s16, 0
      %p92 = por %p90, %p91
      %p93 = scmp.ne.s32.totalorder %s85, %s87
      %p94 = scmp.eq.s32.totalorder %s21, 1
      %p95 = por %p93, %p94
      %p96 = scmp.ne.s32.totalorder %s87, %s88
      %p97 = scmp.eq.s32.totalorder %s21, 0
      %p98 = por %p96, %p97
      %p99 = scmp.ne.s32.totalorder %s87, %s88
      %p100 = scmp.eq.s32.totalorder %s22, 1
      %p101 = por %p99, %p100
      %p103 = scmp.ne.s32.totalorder %s88, %s102
      %p104 = scmp.eq.s32.totalorder %s22, 0
      %p105 = por %p103, %p104
      %s107 = sadd.s32 %s106, 1
      %p110 = scmp.eq.s32.totalorder %s16, 1
      %p111 = scmp.ne.s32.totalorder %s106, %s108
      %p112 = scmp.eq.s32.totalorder %s16, 0
      %p113 = por %p111, %p112
      %p114 = scmp.ne.s32.totalorder %s106, %s108
      %p115 = scmp.eq.s32.totalorder %s21, 1
      %p116 = por %p114, %p115
      %p117 = scmp.ne.s32.totalorder %s108, %s109
      %p118 = scmp.eq.s32.totalorder %s21, 0
      %p119 = por %p117, %p118
      %p120 = scmp.ne.s32.totalorder %s108, %s109
      %p121 = scmp.eq.s32.totalorder %s22, 1
      %p122 = por %p120, %p121
      %p124 = scmp.ne.s32.totalorder %s109, %s123
      %p125 = scmp.eq.s32.totalorder %s22, 0
      %p126 = por %p124, %p125
      %s128 = sadd.s32 %s127, 1
      %p131 = scmp.eq.s32.totalorder %s16, 1
      %p132 = scmp.ne.s32.totalorder %s127, %s129
      %p133 = scmp.eq.s32.totalorder %s16, 0
      %p134 = por %p132, %p133
      %p135 = scmp.ne.s32.totalorder %s127, %s129
      %p136 = scmp.eq.s32.totalorder %s21, 1
      %p137 = por %p135, %p136
      %p138 = scmp.ne.s32.totalorder %s129, %s130
      %p139 = scmp.eq.s32.totalorder %s21, 0
      %p140 = por %p138, %p139
      %p141 = scmp.ne.s32.totalorder %s129, %s130
      %p142 = scmp.eq.s32.totalorder %s22, 1
      %p143 = por %p141, %p142
      %p145 = scmp.ne.s32.totalorder %s130, %s144
      %p146 = scmp.eq.s32.totalorder %s22, 0
      %p147 = por %p145, %p146
      %s149 = sadd.s32 %s148, 1
      %p152 = scmp.eq.s32.totalorder %s16, 1
      %p153 = scmp.ne.s32.totalorder %s148, %s150
      %p154 = scmp.eq.s32.totalorder %s16, 0
      %p155 = por %p153, %p154
      %p156 = scmp.ne.s32.totalorder %s148, %s150
      %p157 = scmp.eq.s32.totalorder %s21, 1
      %p158 = por %p156, %p157
      %p159 = scmp.ne.s32.totalorder %s150, %s151
      %p160 = scmp.eq.s32.totalorder %s21, 0
      %p161 = por %p159, %p160
      %p162 = scmp.ne.s32.totalorder %s150, %s151
      %p163 = scmp.eq.s32.totalorder %s22, 1
      %p164 = por %p162, %p163
      %p166 = scmp.ne.s32.totalorder %s151, %s165
      %p167 = scmp.eq.s32.totalorder %s22, 0
      %p168 = por %p166, %p167
      %s170 = sadd.s32 %s169, 1
      %p173 = scmp.eq.s32.totalorder %s16, 1
      %p174 = scmp.ne.s32.totalorder %s169, %s171
      %p175 = scmp.eq.s32.totalorder %s16, 0
      %p176 = por %p174, %p175
      %p177 = scmp.ne.s32.totalorder %s169, %s171
      %p178 = scmp.eq.s32.totalorder %s21, 1
      %p179 = por %p177, %p178
      %p180 = scmp.ne.s32.totalorder %s171, %s172
      %p181 = scmp.eq.s32.totalorder %s21, 0
      %p182 = por %p180, %p181
      %p183 = scmp.ne.s32.totalorder %s171, %s172
      %p184 = scmp.eq.s32.totalorder %s22, 1
      %p185 = por %p183, %p184
      %p187 = scmp.ne.s32.totalorder %s172, %s186
      %p188 = scmp.eq.s32.totalorder %s22, 0
      %p189 = por %p187, %p188
      %s190 = ssub.s32 %s23, %s35
      %s191 = ssub.s32 %s24, %s31
      %s192 = sor.u32 %s190, %s191
      %p193 = scmp.eq.s32.totalorder %s192, 0
      %s195 = sadd.s32 %s194, 1
      %s196 = scalar_select %p193, %s194, %s195
      %p199 = pneg %p193
      %p200 = scmp.eq.s32.totalorder %s16, 1
      %p201 = por %p199, %p200
      %p202 = scmp.ne.s32.totalorder %s194, %s197
      %p203 = scmp.eq.s32.totalorder %s16, 0
      %p204 = por %p202, %p203
      %p205 = scmp.ne.s32.totalorder %s194, %s197
      %p206 = scmp.eq.s32.totalorder %s21, 1
      %p207 = por %p205, %p206
      %p208 = scmp.ne.s32.totalorder %s197, %s198
      %p209 = scmp.eq.s32.totalorder %s21, 0
      %p210 = por %p208, %p209
      %p211 = scmp.ne.s32.totalorder %s197, %s198
      %p212 = scmp.eq.s32.totalorder %s22, 1
      %p213 = por %p211, %p212
      %p215 = scmp.ne.s32.totalorder %s198, %s214
      %p216 = scmp.eq.s32.totalorder %s22, 0
      %p217 = por %p215, %p216
      %p218 = scmp.le.s32.totalorder 1, %s16
      %p219 = scmp.lt.s32.totalorder %s16, 3
      %p220 = pnand %p218, %p219
      %p221 = pneg %p220
      // Predicated region
      $region9: #{mlp_flat.1} parent=5 // pred_check
        _
      $region10: #{mlp_flat.1} parent=5 // pred_check_branch
        %223 = sbr.rel (%p220) target = $region12
      $region11: #{mlp_flat.1} parent=5 // pred_region
        %s224 = ssub.s32 %s16, 1
        // Predicated region
        $region13: #{mlp_flat.1} parent=11 // pred_check
          %p225 = pneg %p77
        $region14: #{mlp_flat.1} parent=11 // pred_check_branch
          %227 = sbr.rel (%p225) target = $region16
        $region15: #{mlp_flat.1} parent=11 // pred_region
          _
        $region16: #{mlp_flat.1} parent=11 // pred_fallthru
          _
        // Predicated region
        $region17: #{mlp_flat.1} parent=11 // pred_check
          %p228 = pneg %p98
        $region18: #{mlp_flat.1} parent=11 // pred_check_branch
          %230 = sbr.rel (%p228) target = $region20
        $region19: #{mlp_flat.1} parent=11 // pred_region
          _
        $region20: #{mlp_flat.1} parent=11 // pred_fallthru
          _
        // Predicated region
        $region21: #{mlp_flat.1} parent=11 // pred_check
          %p231 = pneg %p119
        $region22: #{mlp_flat.1} parent=11 // pred_check_branch
          %233 = sbr.rel (%p231) target = $region24
        $region23: #{mlp_flat.1} parent=11 // pred_region
          _
        $region24: #{mlp_flat.1} parent=11 // pred_fallthru
          _
        // Predicated region
        $region25: #{mlp_flat.1} parent=11 // pred_check
          %p234 = pneg %p140
        $region26: #{mlp_flat.1} parent=11 // pred_check_branch
          %236 = sbr.rel (%p234) target = $region28
        $region27: #{mlp_flat.1} parent=11 // pred_region
          _
        $region28: #{mlp_flat.1} parent=11 // pred_fallthru
          _
        // Predicated region
        $region29: #{mlp_flat.1} parent=11 // pred_check
          %p237 = pneg %p161
        $region30: #{mlp_flat.1} parent=11 // pred_check_branch
          %239 = sbr.rel (%p237) target = $region32
        $region31: #{mlp_flat.1} parent=11 // pred_region
          _
        $region32: #{mlp_flat.1} parent=11 // pred_fallthru
          _
        // Predicated region
        $region33: #{mlp_flat.1} parent=11 // pred_check
          %p240 = pneg %p182
        $region34: #{mlp_flat.1} parent=11 // pred_check_branch
          %242 = sbr.rel (%p240) target = $region36
        $region35: #{mlp_flat.1} parent=11 // pred_region
          _
        $region36: #{mlp_flat.1} parent=11 // pred_fallthru
          _
      $region12: #{mlp_flat.1} parent=5 // pred_fallthru
        _
      %p243 = scmp.lt.s32.totalorder %s16, 2
      // Predicated region
      $region37: #{mlp_flat.1} parent=5 // pred_check
        %p244 = pneg %p243
      $region38: #{mlp_flat.1} parent=5 // pred_check_branch
        %246 = sbr.rel (%p244) target = $region40
      $region39: #{mlp_flat.1} parent=5 // pred_region
        // Predicated region
        $region41: #{mlp_flat.1} parent=39 // pred_check
          %p247 = pneg %p50
        $region42: #{mlp_flat.1} parent=39 // pred_check_branch
          %249 = sbr.rel (%p247) target = $region44
        $region43: #{mlp_flat.1} parent=39 // pred_region
          %s250 = smul.u32 2, %s24
          %p251 = scmp.lt.s32.totalorder %s23, 1
          %s252 = scalar_select %p251, %s23, 1
          %p253 = scmp.lt.s32.totalorder %s250, 1
          %s254 = scalar_select %p253, %s250, 1
          %s255 = smul.addr %s252, 2
          %s256 = sadd.s32 %s254, %s255
          %s257 = smul.addr %s256, 4
          %s258 = scalar_lea.vmem %s0, %s257
          %s259 = smul.u32 2, %s24
        $region44: #{mlp_flat.1} parent=39 // pred_fallthru
          _
      $region40: #{mlp_flat.1} parent=5 // pred_fallthru
        _
      %p260 = scmp.le.s32.totalorder 1, %s16
      %p261 = scmp.lt.s32.totalorder %s16, 3
      %p262 = pnand %p260, %p261
      %p263 = pneg %p262
      // Predicated region
      $region45: #{mlp_flat.1} parent=5 // pred_check
        _
      $region46: #{mlp_flat.1} parent=5 // pred_check_branch
        %265 = sbr.rel (%p262) target = $region48
      $region47: #{mlp_flat.1} parent=5 // pred_region
        %s266 = ssub.s32 %s16, 1
        %s267 = smul.u32 2, %s26
        %p268 = scmp.lt.s32.totalorder %s25, 1
        %s269 = scalar_select %p268, %s25, 1
        %p270 = scmp.lt.s32.totalorder %s267, 1
        %s271 = scalar_select %p270, %s267, 1
        %s272 = smul.addr %s269, 2
        %s273 = sadd.s32 %s271, %s272
        %s274 = smul.addr %s273, 4
        %s275 = scalar_lea.vmem %s0, %s274
        %p276 = pneg %p56
        %p277 = pneg %p53
        %p278 = pneg %p77
        %p279 = pneg %p74
        %p280 = pneg %p98
        %p281 = pneg %p95
        %p282 = pneg %p119
        %p283 = pneg %p116
        %p284 = pneg %p140
        %p285 = pneg %p137
        %p286 = pneg %p161
        %p287 = pneg %p158
        %p288 = pneg %p182
        %p289 = pneg %p179
        %p290 = pneg %p210
        %p291 = pneg %p207
        %s292 = sand.u32 %s197, 1
        %s293 = scalar_lea.sflag [#allocation3], %s292
        %s294 = sand.u32 %s197, 1
        %s295 = smul.addr %s294, 8
        %s296 = scalar_lea.vmem [#allocation2], %s295
        %s297 = smul.u32 2, %s26
        %p298 = scmp.lt.s32.totalorder %s25, 1
        %s299 = scalar_select %p298, %s25, 1
        %p300 = scmp.lt.s32.totalorder %s297, 1
        %s301 = scalar_select %p300, %s297, 1
        %s302 = smul.addr %s299, 2
        %s303 = sadd.s32 %s301, %s302
        %s304 = smul.addr %s303, 4
        %s305 = scalar_lea.vmem %s0, %s304
        %s306 = smul.u32 2, %s26
        %s307 = smul.u32 2, %s26
        %v308 = vld [vmem:[%s305] sm:$0xff]
        %v309 = vld [vmem:[%s1] sm:$0xff]
        %v310 = vld [vmem:[%s2] sm:$0xff]
        %312 = vset.pattern.permute.xlu0 0
        %313 = vperm.xlu0 %312, %v310
        %v314 = vpop.permute.xlu0 %313
        %v317 = vcombine.high %v308, %v308
        %vm318 = vcmask 31744
        %v320 = vsel %vm318, %v309, 0
        %vm322 = vcmask 1043456
        %v323 = vsel %vm322, %v308, 0
        %v325 = vsel %vm322, %v317, 0
        %327 = vmatprep.subr.mxu0 %v325
        %328 = vmatpush1.msra.mxu0 %v323
        %329 = vmatprep.subr.mxu0 0.0
        %330 = vmatpush1.msra.mxu0 0.0
        %331 = vmatprep.subr.mxu0 0.0
        %332 = vmatpush1.msra.mxu0 0.0
        %333 = vmatprep.subr.mxu0 0.0
        %334 = vmatpush1.msra.mxu0 0.0
        %335 = vmatprep.subr.mxu0 0.0
        %336 = vmatpush1.msra.mxu0 0.0
        %337 = vmatprep.subr.mxu0 0.0
        %338 = vmatpush1.msra.mxu0 0.0
        %339 = vmatprep.subr.mxu0 0.0
        %340 = vmatpush1.msra.mxu0 0.0
        %341 = vmatprep.subr.mxu0 0.0
        %342 = vmatpush1.msra.mxu0 0.0
        %343 = vmatprep.subr.mxu0 0.0
        %344 = vmatpush1.msra.mxu0 0.0
        %345 = vmatprep.subr.mxu0 0.0
        %346 = vmatpush1.msra.mxu0 0.0
        %347 = vmatprep.subr.mxu0 0.0
        %348 = vmatpush1.msra.mxu0 0.0
        %349 = vmatprep.subr.mxu0 0.0
        %350 = vmatpush1.msra.mxu0 0.0
        %351 = vmatprep.subr.mxu0 0.0
        %352 = vmatpush1.msra.mxu0 0.0
        %353 = vmatprep.subr.mxu0 0.0
        %354 = vmatpush1.msra.mxu0 0.0
        %355 = vmatprep.subr.mxu0 0.0
        %356 = vmatpush1.msra.mxu0 0.0
        %357 = vmatprep.subr.mxu0 0.0
        %358 = vmatpush1.msra.mxu0 0.0
        %359 = vmatprep.subr.mxu0 0.0
        %360 = vmatpush1.msra.mxu0 0.0
        %361 = vmatprep.subr.mxu0 0.0
        %362 = vmatpush1.msra.mxu0 0.0
        %363 = vmatprep.subr.mxu0 0.0
        %364 = vmatpush1.msra.mxu0 0.0
        %365 = vmatprep.subr.mxu0 0.0
        %366 = vmatpush1.msra.mxu0 0.0
        %367 = vmatprep.subr.mxu0 0.0
        %368 = vmatpush1.msra.mxu0 0.0
        %369 = vmatprep.subr.mxu0 0.0
        %370 = vmatpush1.msra.mxu0 0.0
        %371 = vmatprep.subr.mxu0 0.0
        %372 = vmatpush1.msra.mxu0 0.0
        %373 = vmatprep.subr.mxu0 0.0
        %374 = vmatpush1.msra.mxu0 0.0
        %375 = vmatprep.subr.mxu0 0.0
        %376 = vmatpush1.msra.mxu0 0.0
        %377 = vmatprep.subr.mxu0 0.0
        %378 = vmatpush1.msra.mxu0 0.0
        %379 = vmatprep.subr.mxu0 0.0
        %380 = vmatpush1.msra.mxu0 0.0
        %381 = vmatprep.subr.mxu0 0.0
        %382 = vmatpush1.msra.mxu0 0.0
        %383 = vmatprep.subr.mxu0 0.0
        %384 = vmatpush1.msra.mxu0 0.0
        %385 = vmatprep.subr.mxu0 0.0
        %386 = vmatpush1.msra.mxu0 0.0
        %387 = vmatprep.subr.mxu0 0.0
        %388 = vmatpush1.msra.mxu0 0.0
        %389 = vmatprep.subr.mxu0 0.0
        %390 = vmatpush1.msra.mxu0 0.0
        %391 = vmatprep.mubr.f32.mxu0 0.0
        %392 = vmatmul.mubr.f32.gmra.mrb[0].mxu0 %v320
        %v393 = vpop.f32.mrb[0].mxu0
        %v394 = vadd.f32 %v314, %v393
        %v395 = vpop.f32.mrb[0].mxu0
        %v396 = vadd.f32 %v314, %v395
        %397 = vdwg.mxu0
        %v398 = vmax.f32 %v394, 0.0
        %v399 = vmax.f32 %v396, 0.0
        %v400 = vld [vmem:[%s3] sm:$0xff]
        %v401 = vld [vmem:[%s4] sm:$0xff]
        %403 = vset.pattern.permute.xlu0 0
        %404 = vperm.xlu0 %403, %v401
        %v405 = vpop.permute.xlu0 %404
        %vm407 = vcmask 64512
        %v409 = vsel %vm407, %v400, 0
        %411 = vmatprep.subr.mxu0 %v399
        %412 = vmatpush1.msra.mxu0 %v398
        %413 = vmatprep.subr.mxu0 0.0
        %414 = vmatpush1.msra.mxu0 0.0
        %415 = vmatprep.subr.mxu0 0.0
        %416 = vmatpush1.msra.mxu0 0.0
        %417 = vmatprep.subr.mxu0 0.0
        %418 = vmatpush1.msra.mxu0 0.0
        %419 = vmatprep.subr.mxu0 0.0
        %420 = vmatpush1.msra.mxu0 0.0
        %421 = vmatprep.subr.mxu0 0.0
        %422 = vmatpush1.msra.mxu0 0.0
        %423 = vmatprep.subr.mxu0 0.0
        %424 = vmatpush1.msra.mxu0 0.0
        %425 = vmatprep.subr.mxu0 0.0
        %426 = vmatpush1.msra.mxu0 0.0
        %427 = vmatprep.subr.mxu0 0.0
        %428 = vmatpush1.msra.mxu0 0.0
        %429 = vmatprep.subr.mxu0 0.0
        %430 = vmatpush1.msra.mxu0 0.0
        %431 = vmatprep.subr.mxu0 0.0
        %432 = vmatpush1.msra.mxu0 0.0
        %433 = vmatprep.subr.mxu0 0.0
        %434 = vmatpush1.msra.mxu0 0.0
        %435 = vmatprep.subr.mxu0 0.0
        %436 = vmatpush1.msra.mxu0 0.0
        %437 = vmatprep.subr.mxu0 0.0
        %438 = vmatpush1.msra.mxu0 0.0
        %439 = vmatprep.subr.mxu0 0.0
        %440 = vmatpush1.msra.mxu0 0.0
        %441 = vmatprep.subr.mxu0 0.0
        %442 = vmatpush1.msra.mxu0 0.0
        %443 = vmatprep.subr.mxu0 0.0
        %444 = vmatpush1.msra.mxu0 0.0
        %445 = vmatprep.subr.mxu0 0.0
        %446 = vmatpush1.msra.mxu0 0.0
        %447 = vmatprep.subr.mxu0 0.0
        %448 = vmatpush1.msra.mxu0 0.0
        %449 = vmatprep.subr.mxu0 0.0
        %450 = vmatpush1.msra.mxu0 0.0
        %451 = vmatprep.subr.mxu0 0.0
        %452 = vmatpush1.msra.mxu0 0.0
        %453 = vmatprep.subr.mxu0 0.0
        %454 = vmatpush1.msra.mxu0 0.0
        %455 = vmatprep.subr.mxu0 0.0
        %456 = vmatpush1.msra.mxu0 0.0
        %457 = vmatprep.subr.mxu0 0.0
        %458 = vmatpush1.msra.mxu0 0.0
        %459 = vmatprep.subr.mxu0 0.0
        %460 = vmatpush1.msra.mxu0 0.0
        %461 = vmatprep.subr.mxu0 0.0
        %462 = vmatpush1.msra.mxu0 0.0
        %463 = vmatprep.subr.mxu0 0.0
        %464 = vmatpush1.msra.mxu0 0.0
        %465 = vmatprep.subr.mxu0 0.0
        %466 = vmatpush1.msra.mxu0 0.0
        %467 = vmatprep.subr.mxu0 0.0
        %468 = vmatpush1.msra.mxu0 0.0
        %469 = vmatprep.subr.mxu0 0.0
        %470 = vmatpush1.msra.mxu0 0.0
        %471 = vmatprep.subr.mxu0 0.0
        %472 = vmatpush1.msra.mxu0 0.0
        %473 = vmatprep.subr.mxu0 0.0
        %474 = vmatpush1.msra.mxu0 0.0
        %475 = vmatprep.mubr.f32.mxu0 0.0
        %476 = vmatmul.mubr.f32.gmra.mrb[0].mxu0 %v409
        %v477 = vpop.f32.mrb[0].mxu0
        %v478 = vadd.f32 %v405, %v477
        %v479 = vpop.f32.mrb[0].mxu0
        %v480 = vadd.f32 %v405, %v479
        %481 = vdwg.mxu0
        %v482 = vmax.f32 %v478, 0.0
        %v483 = vmax.f32 %v480, 0.0
        %v484 = vld [vmem:[%s5] sm:$0xf]
        %v485 = vld [vmem:[%s6] sm:$0xf]
        %487 = vset.pattern.permute.xlu0 0
        %488 = vperm.xlu0 %487, %v485
        %v489 = vpop.permute.xlu0 %488
        %v492 = vsel %vm407, %v484, 0
        %494 = vmatprep.subr.mxu0 %v483
        %495 = vmatpush1.msra.mxu0 %v482
        %496 = vmatprep.subr.mxu0 0.0
        %497 = vmatpush1.msra.mxu0 0.0
        %498 = vmatprep.subr.mxu0 0.0
        %499 = vmatpush1.msra.mxu0 0.0
        %500 = vmatprep.subr.mxu0 0.0
        %501 = vmatpush1.msra.mxu0 0.0
        %502 = vmatprep.subr.mxu0 0.0
        %503 = vmatpush1.msra.mxu0 0.0
        %504 = vmatprep.subr.mxu0 0.0
        %505 = vmatpush1.msra.mxu0 0.0
        %506 = vmatprep.subr.mxu0 0.0
        %507 = vmatpush1.msra.mxu0 0.0
        %508 = vmatprep.subr.mxu0 0.0
        %509 = vmatpush1.msra.mxu0 0.0
        %510 = vmatprep.subr.mxu0 0.0
        %511 = vmatpush1.msra.mxu0 0.0
        %512 = vmatprep.subr.mxu0 0.0
        %513 = vmatpush1.msra.mxu0 0.0
        %514 = vmatprep.subr.mxu0 0.0
        %515 = vmatpush1.msra.mxu0 0.0
        %516 = vmatprep.subr.mxu0 0.0
        %517 = vmatpush1.msra.mxu0 0.0
        %518 = vmatprep.subr.mxu0 0.0
        %519 = vmatpush1.msra.mxu0 0.0
        %520 = vmatprep.subr.mxu0 0.0
        %521 = vmatpush1.msra.mxu0 0.0
        %522 = vmatprep.subr.mxu0 0.0
        %523 = vmatpush1.msra.mxu0 0.0
        %524 = vmatprep.subr.mxu0 0.0
        %525 = vmatpush1.msra.mxu0 0.0
        %526 = vmatprep.subr.mxu0 0.0
        %527 = vmatpush1.msra.mxu0 0.0
        %528 = vmatprep.subr.mxu0 0.0
        %529 = vmatpush1.msra.mxu0 0.0
        %530 = vmatprep.subr.mxu0 0.0
        %531 = vmatpush1.msra.mxu0 0.0
        %532 = vmatprep.subr.mxu0 0.0
        %533 = vmatpush1.msra.mxu0 0.0
        %534 = vmatprep.subr.mxu0 0.0
        %535 = vmatpush1.msra.mxu0 0.0
        %536 = vmatprep.subr.mxu0 0.0
        %537 = vmatpush1.msra.mxu0 0.0
        %538 = vmatprep.subr.mxu0 0.0
        %539 = vmatpush1.msra.mxu0 0.0
        %540 = vmatprep.subr.mxu0 0.0
        %541 = vmatpush1.msra.mxu0 0.0
        %542 = vmatprep.subr.mxu0 0.0
        %543 = vmatpush1.msra.mxu0 0.0
        %544 = vmatprep.subr.mxu0 0.0
        %545 = vmatpush1.msra.mxu0 0.0
        %546 = vmatprep.subr.mxu0 0.0
        %547 = vmatpush1.msra.mxu0 0.0
        %548 = vmatprep.subr.mxu0 0.0
        %549 = vmatpush1.msra.mxu0 0.0
        %550 = vmatprep.subr.mxu0 0.0
        %551 = vmatpush1.msra.mxu0 0.0
        %552 = vmatprep.subr.mxu0 0.0
        %553 = vmatpush1.msra.mxu0 0.0
        %554 = vmatprep.subr.mxu0 0.0
        %555 = vmatpush1.msra.mxu0 0.0
        %556 = vmatprep.subr.mxu0 0.0
        %557 = vmatpush1.msra.mxu0 0.0
        %558 = vmatprep.mubr.f32.mxu0 0.0
        %559 = vmatmul.mubr.f32.gmra.mrb[0].mxu0 %v492
        %v560 = vpop.f32.mrb[0].mxu0
        %v561 = vadd.f32 %v489, %v560
        %v562 = vpop.f32.mrb[0].mxu0
        %v563 = vadd.f32 %v489, %v562
        %564 = vdwg.mxu0
        %v567 = vcombine.low %v561, %v563
        %569 = vst [vmem:[%s296] sm:$0xff] %v567
        %s570 = sand.u32 %s197, 1
        %s571 = scalar_lea.sflag [#allocation3], %s570
        %s572 = sand.u32 %s197, 1
        %s573 = smul.addr %s572, 8
        %s574 = scalar_lea.vmem [#allocation2], %s573
        // Predicated region
        $region49: #{mlp_flat.1} parent=47 // pred_check
          %p575 = pneg %p207
        $region50: #{mlp_flat.1} parent=47 // pred_check_branch
          %577 = sbr.rel (%p575) target = $region52
        $region51: #{mlp_flat.1} parent=47 // pred_region
          %s578 = smul.u32 2, %s26
          %s580 = ssub.s32 128, 128
          %581 = vsyncadd %s571, %s580
          %s582 = smul.addr %s25, 2
          %s583 = sadd.s32 %s578, %s582
          %s584 = smul.addr %s583, 64
          %s585 = scalar_lea.hbm %s7, %s584
          %s587 = sshll.u32 %s574, 4
          %s588 = int_to_ptr.vmem [resolvable:$true] %s587
          %590 = dma.vmem_to_hbm [thread:$0]  %s588, 128, %s585, %s571
        $region52: #{mlp_flat.1} parent=47 // pred_fallthru
          _
      $region48: #{mlp_flat.1} parent=5 // pred_fallthru
        _
      %p591 = scmp.le.s32.totalorder 2, %s16
      // Predicated region
      $region53: #{mlp_flat.1} parent=5 // pred_check
        %p592 = pneg %p591
      $region54: #{mlp_flat.1} parent=5 // pred_check_branch
        %594 = sbr.rel (%p592) target = $region56
      $region55: #{mlp_flat.1} parent=5 // pred_region
        %s595 = ssub.s32 %s16, 2
        // Predicated region
        $region57: #{mlp_flat.1} parent=55 // pred_check
          %p596 = pneg %p213
        $region58: #{mlp_flat.1} parent=55 // pred_check_branch
          %598 = sbr.rel (%p596) target = $region60
        $region59: #{mlp_flat.1} parent=55 // pred_region
          %s599 = sand.u32 %s198, 1
          %s600 = scalar_lea.sflag [#allocation3], %s599
          %s601 = sand.u32 %s198, 1
          %s602 = smul.addr %s601, 8
          %s603 = scalar_lea.vmem [#allocation2], %s602
          %604 = dma.done %s600, 128
        $region60: #{mlp_flat.1} parent=55 // pred_fallthru
          _
      $region56: #{mlp_flat.1} parent=5 // pred_fallthru
        _
    $region6: #{mlp_flat.1} parent=1 // loop_footer
      %s20 = sadd.s32 1, %s16
    $region7: #{mlp_flat.1} parent=1 // loop_footer_branch
      %15 = sbr.rel target = $region3
    $region8: #{mlp_flat.1} parent=1 // loop_exit
      _
    %605 = vsyncpa [#allocation3], 1
    %s606 = scalar_lea.sflag [#allocation3], 1
    %607 = vsyncpa %s606, 1

</llo_original>
